<compile_context>
chip_gen: v5e
topology: v5e:2x2
jax: 0.10.0
libtpu: 0.0.40
codegen_flags: <defaults>
</compile_context>

<pallas_src>
import jax
import jax.numpy as jnp
from jax.experimental import pallas as pl
from jax.experimental.pallas import tpu as pltpu

HIDDEN_DIM = 256
IMAGE_DIM = 28 * 28        # 784


def _round_up(x, m):
    return ((x + m - 1) // m) * m


def _disc_kernel(x_ref, w1_ref, b1_ref, w2_ref, b2_ref, w3_ref, b3_ref, o_ref):
    # Whole MLP hot path stays in VMEM for one batch tile per grid step.
    # x tile arrives as f32 straight from the user input (no wrapper copy);
    # cast to bf16 only for the MXU operand.
    x = x_ref[...].astype(jnp.bfloat16)                                  # (tb, 784) bf16

    # Layer 1: bf16 MXU matmul, f32 accumulation; bias + LeakyReLU on VPU in f32.
    h = jnp.dot(x, w1_ref[...], preferred_element_type=jnp.float32)      # (tb, 256) f32
    h = h + b1_ref[...]
    h = jnp.where(h > 0, h, 0.2 * h)                                     # LeakyReLU(0.2)

    # Layer 2.
    h = jnp.dot(h.astype(jnp.bfloat16), w2_ref[...],
                preferred_element_type=jnp.float32)                      # (tb, 256) f32
    h = h + b2_ref[...]
    h = jnp.where(h > 0, h, 0.2 * h)

    # Layer 3 (out_features == 1): broadcast-multiply + lane reduce on VPU/XLU
    # instead of a lane-sparse (256, 1) MXU matmul.
    zc = jnp.sum(h * w3_ref[...], axis=-1, keepdims=True)                # (tb, 1) f32

    # Transpose FIRST so the bias/exp/reciprocal epilogue runs on a lane-dense
    # (1, tb) row instead of a (tb, 1) column (8x fewer vregs touched).
    z = jnp.transpose(zc) + b3_ref[...]                                  # (1, tb) f32
    z = jnp.clip(z, -30.0, 30.0)                                         # keep exp finite

    # Sigmoid: exp and approximate reciprocal both land on the (idle) EUP slot.
    v = pl.reciprocal(1.0 + jnp.exp(-z), approx=True)                    # (1, tb) f32

    # Lane-dense store: batch lies along the 128-wide lane axis.
    o_ref[...] = v.astype(o_ref.dtype)                                   # (1, tb)


def discriminator_forward(img, params, *, tb=None):
    """img: (B, 1, 28, 28) float32 NCHW. Returns validity (B, 1) float32."""
    w1, b1, w2, b2, w3, b3 = params
    B = img.shape[0]

    # img.view(B, -1); stays f32, no padding of the 784 feature axis and no
    # materialized bf16 copy (cast happens in-kernel).
    x = img.reshape(B, -1).astype(jnp.float32)                           # (B, 784)

    # Adaptive batch tile: big enough to amortize per-grid-step overhead, small
    # enough that tiny batches are not padded 32x.  Cap at 512 so any B > 512
    # still yields >= 2 grid steps (feeds both v7x TensorCores).
    if tb is None:
        tb = min(512, _round_up(max(B, 8), 128))
    Bp = _round_up(B, tb)
    if Bp != B:
        x = jnp.pad(x, ((0, Bp - B), (0, 0)))

    w1b = w1.astype(jnp.bfloat16)                                        # (784, 256)
    w2b = w2.astype(jnp.bfloat16)                                        # (256, 256)
    b1f = b1.astype(jnp.float32)                                         # (1, 256)
    b2f = b2.astype(jnp.float32)                                         # (1, 256)
    w3r = jnp.reshape(w3, (1, HIDDEN_DIM)).astype(jnp.float32)           # row for VPU reduce
    b3f = jnp.reshape(b3, (1, 1)).astype(jnp.float32)

    grid = (Bp // tb,)
    full = lambda i: (0, 0)   # weights/biases use full-extent blocks

    out = pl.pallas_call(
        _disc_kernel,
        out_shape=jax.ShapeDtypeStruct((1, Bp), jnp.float32),
        grid_spec=pltpu.PrefetchScalarGridSpec(
            num_scalar_prefetch=0,
            grid=grid,
            in_specs=[
                pl.BlockSpec((tb, IMAGE_DIM), lambda i: (i, 0)),         # x tile (f32)
                pl.BlockSpec((IMAGE_DIM, HIDDEN_DIM), full),             # w1 (bf16)
                pl.BlockSpec((1, HIDDEN_DIM), full),                     # b1
                pl.BlockSpec((HIDDEN_DIM, HIDDEN_DIM), full),            # w2 (bf16)
                pl.BlockSpec((1, HIDDEN_DIM), full),                     # b2
                pl.BlockSpec((1, HIDDEN_DIM), full),                     # w3 row (f32)
                pl.BlockSpec((1, 1), full),                              # b3
            ],
            out_specs=pl.BlockSpec((1, tb), lambda i: (0, i)),           # lane-dense
        ),
        compiler_params=pltpu.CompilerParams(
            dimension_semantics=("parallel",),
        ),
    )(x, w1b, b1f, w2b, b2f, w3r, b3f)

    # (1, Bp) -> (B, 1), dropping batch padding.
    return out.reshape(Bp, 1)[:B]


def init_params(key):
    """nn.Linear-style init: U(-1/sqrt(fan_in), +1/sqrt(fan_in)).
    Weights stored as (in_features, out_features) so the kernel does x @ W."""
    ks = jax.random.split(key, 6)

    def linear(kw, kb, fan_in, fan_out):
        bound = 1.0 / jnp.sqrt(jnp.float32(fan_in))
        w = jax.random.uniform(kw, (fan_in, fan_out), jnp.float32, -bound, bound)
        b = jax.random.uniform(kb, (1, fan_out), jnp.float32, -bound, bound)
        return w, b

    w1, b1 = linear(ks[0], ks[1], IMAGE_DIM, HIDDEN_DIM)
    w2, b2 = linear(ks[2], ks[3], HIDDEN_DIM, HIDDEN_DIM)
    w3, b3 = linear(ks[4], ks[5], HIDDEN_DIM, 1)
    return (w1, b1, w2, b2, w3, b3)


def reference_forward(img, params):
    """Pure-JAX f32 reference matching the PyTorch module."""
    w1, b1, w2, b2, w3, b3 = params
    x = img.reshape(img.shape[0], -1)
    h = x @ w1 + b1
    h = jnp.where(h > 0, h, 0.2 * h)
    h = h @ w2 + b2
    h = jnp.where(h > 0, h, 0.2 * h)
    z = h @ w3 + b3
    return jax.nn.sigmoid(z)


if __name__ == "__main__":
    key = jax.random.PRNGKey(0)
    k_img, k_params = jax.random.split(key)

    # Small batch of MNIST-shaped images, NCHW like the PyTorch module expects.
    B = 8
    img = jax.random.normal(k_img, (B, 1, 28, 28), dtype=jnp.float32)
    params = init_params(k_params)

    validity = discriminator_forward(img, params)
    validity = jax.block_until_ready(validity)

    # Shape + sigmoid-range sanity checks.
    assert validity.shape == (B, 1)
    assert bool(jnp.all((validity >= 0.0) & (validity <= 1.0)))

    # Numerical check against the f32 reference (bf16 matmuls + approx
    # reciprocal -> loose tolerance).
    ref = reference_forward(img, params)
    max_err = float(jnp.max(jnp.abs(validity - ref)))
    assert max_err < 2e-2, f"mismatch vs reference: {max_err}"

    print("KERNEL_OK")
</pallas_src>

<mosaic_0001>
module attributes {stable_mosaic.version = 11 : i64} {
  func.func @_disc_kernel(%arg0: i32, %arg1: memref<128x784xf32, #tpu.memory_space<vmem>>, %arg2: memref<784x256xbf16, #tpu.memory_space<vmem>>, %arg3: memref<1x256xf32, #tpu.memory_space<vmem>>, %arg4: memref<256x256xbf16, #tpu.memory_space<vmem>>, %arg5: memref<1x256xf32, #tpu.memory_space<vmem>>, %arg6: memref<1x256xf32, #tpu.memory_space<vmem>>, %arg7: memref<1x1xf32, #tpu.memory_space<vmem>>, %arg8: memref<1x128xf32, #tpu.memory_space<vmem>>) attributes {dimension_semantics = [#tpu.dimension_semantics<parallel>], iteration_bounds = array<i64: 1>, scalar_prefetch = 0 : i64, scratch_operands = 0 : i64, tpu.core_type = #tpu.core_type<tc>, window_params = [{transform_indices = @transform_0, window_bounds = array<i64: 128, 784>}, {pipeline_mode = #tpu.pipeline_mode<synchronous>, transform_indices = @transform_1, window_bounds = array<i64: 784, 256>}, {pipeline_mode = #tpu.pipeline_mode<synchronous>, transform_indices = @transform_2, window_bounds = array<i64: 1, 256>}, {pipeline_mode = #tpu.pipeline_mode<synchronous>, transform_indices = @transform_3, window_bounds = array<i64: 256, 256>}, {pipeline_mode = #tpu.pipeline_mode<synchronous>, transform_indices = @transform_4, window_bounds = array<i64: 1, 256>}, {pipeline_mode = #tpu.pipeline_mode<synchronous>, transform_indices = @transform_5, window_bounds = array<i64: 1, 256>}, {pipeline_mode = #tpu.pipeline_mode<synchronous>, transform_indices = @transform_6, window_bounds = array<i64: 1, 1>}, {transform_indices = @transform_7, window_bounds = array<i64: 1, 128>}]} {
    %c0 = arith.constant 0 : index
    %c0_0 = arith.constant 0 : index
    %0 = vector.load %arg1[%c0, %c0_0] : memref<128x784xf32, #tpu.memory_space<vmem>>, vector<128x784xf32>
    %1 = arith.truncf %0 : vector<128x784xf32> to vector<128x784xbf16>
    %c0_1 = arith.constant 0 : index
    %c0_2 = arith.constant 0 : index
    %2 = vector.load %arg2[%c0_1, %c0_2] : memref<784x256xbf16, #tpu.memory_space<vmem>>, vector<784x256xbf16>
    %cst = arith.constant dense<0.000000e+00> : vector<128x256xf32>
    %3 = tpu.matmul %1, %2, %cst {dimension_numbers = #tpu.dot_dimension_numbers<[1], [0], [0], [1], [0, 0, 1, 1], [], []>} : vector<128x784xbf16>, vector<784x256xbf16>, vector<128x256xf32> -> vector<128x256xf32>
    %c0_3 = arith.constant 0 : index
    %c0_4 = arith.constant 0 : index
    %4 = vector.load %arg3[%c0_3, %c0_4] : memref<1x256xf32, #tpu.memory_space<vmem>>, vector<1x256xf32>
    %5 = vector.broadcast %4 : vector<1x256xf32> to vector<128x256xf32>
    %6 = arith.addf %3, %5 : vector<128x256xf32>
    %cst_5 = arith.constant 0.000000e+00 : f32
    %7 = vector.broadcast %cst_5 : f32 to vector<128x256xf32>
    %8 = arith.cmpf ogt, %6, %7 : vector<128x256xf32>
    %cst_6 = arith.constant 2.000000e-01 : f32
    %9 = vector.broadcast %cst_6 : f32 to vector<128x256xf32>
    %10 = arith.mulf %9, %6 : vector<128x256xf32>
    %11 = arith.select %8, %6, %10 : vector<128x256xi1>, vector<128x256xf32>
    %12 = arith.truncf %11 : vector<128x256xf32> to vector<128x256xbf16>
    %c0_7 = arith.constant 0 : index
    %c0_8 = arith.constant 0 : index
    %13 = vector.load %arg4[%c0_7, %c0_8] : memref<256x256xbf16, #tpu.memory_space<vmem>>, vector<256x256xbf16>
    %cst_9 = arith.constant dense<0.000000e+00> : vector<128x256xf32>
    %14 = tpu.matmul %12, %13, %cst_9 {dimension_numbers = #tpu.dot_dimension_numbers<[1], [0], [0], [1], [0, 0, 1, 1], [], []>} : vector<128x256xbf16>, vector<256x256xbf16>, vector<128x256xf32> -> vector<128x256xf32>
    %c0_10 = arith.constant 0 : index
    %c0_11 = arith.constant 0 : index
    %15 = vector.load %arg5[%c0_10, %c0_11] : memref<1x256xf32, #tpu.memory_space<vmem>>, vector<1x256xf32>
    %16 = vector.broadcast %15 : vector<1x256xf32> to vector<128x256xf32>
    %17 = arith.addf %14, %16 : vector<128x256xf32>
    %cst_12 = arith.constant 0.000000e+00 : f32
    %18 = vector.broadcast %cst_12 : f32 to vector<128x256xf32>
    %19 = arith.cmpf ogt, %17, %18 : vector<128x256xf32>
    %cst_13 = arith.constant 2.000000e-01 : f32
    %20 = vector.broadcast %cst_13 : f32 to vector<128x256xf32>
    %21 = arith.mulf %20, %17 : vector<128x256xf32>
    %22 = arith.select %19, %17, %21 : vector<128x256xi1>, vector<128x256xf32>
    %c0_14 = arith.constant 0 : index
    %c0_15 = arith.constant 0 : index
    %23 = vector.load %arg6[%c0_14, %c0_15] : memref<1x256xf32, #tpu.memory_space<vmem>>, vector<1x256xf32>
    %24 = vector.broadcast %23 : vector<1x256xf32> to vector<128x256xf32>
    %25 = arith.mulf %22, %24 : vector<128x256xf32>
    %cst_16 = arith.constant dense<0.000000e+00> : vector<128xf32>
    %26 = vector.multi_reduction <add>, %25, %cst_16 [1] : vector<128x256xf32> to vector<128xf32>
    %27 = vector.shape_cast %26 : vector<128xf32> to vector<128x1xf32>
    %28 = tpu.transpose %27, [1, 0] : vector<128x1xf32> -> vector<1x128xf32>
    %c0_17 = arith.constant 0 : index
    %c0_18 = arith.constant 0 : index
    %29 = vector.load %arg7[%c0_17, %c0_18] : memref<1x1xf32, #tpu.memory_space<vmem>>, vector<1x1xf32>
    %30 = vector.broadcast %29 : vector<1x1xf32> to vector<1x128xf32>
    %31 = arith.addf %28, %30 : vector<1x128xf32>
    %cst_19 = arith.constant -3.000000e+01 : f32
    %cst_20 = arith.constant 3.000000e+01 : f32
    %32 = vector.broadcast %cst_19 : f32 to vector<1x128xf32>
    %33 = arith.maximumf %32, %31 : vector<1x128xf32>
    %34 = vector.broadcast %cst_20 : f32 to vector<1x128xf32>
    %35 = arith.minimumf %34, %33 : vector<1x128xf32>
    %cst_21 = arith.constant 0.000000e+00 : f32
    %36 = vector.broadcast %cst_21 : f32 to vector<1x128xf32>
    %37 = arith.subf %36, %35 : vector<1x128xf32>
    %38 = math.exp %37 : vector<1x128xf32>
    %cst_22 = arith.constant 1.000000e+00 : f32
    %39 = vector.broadcast %cst_22 : f32 to vector<1x128xf32>
    %40 = arith.addf %39, %38 : vector<1x128xf32>
    %41 = tpu.reciprocal %40 {approx = true} : vector<1x128xf32> -> vector<1x128xf32>
    %c0_23 = arith.constant 0 : index
    %c0_24 = arith.constant 0 : index
    %42 = vector.load %arg8[%c0_23, %c0_24] : memref<1x128xf32, #tpu.memory_space<vmem>>, vector<1x128xf32>
    tpu.vector_store %arg8[%c0_23, %c0_24], %41 {strides = array<i32>} : memref<1x128xf32, #tpu.memory_space<vmem>>, vector<1x128xf32>,
    return
  }
  func.func @transform_0(%arg0: i32) -> (i32, i32) {
    %c0_i32 = arith.constant 0 : i32
    %c0_i32_0 = arith.constant 0 : i32
    return %arg0, %c0_i32 : i32, i32
  }
  func.func @transform_1(%arg0: i32) -> (i32, i32) {
    %c0_i32 = arith.constant 0 : i32
    %c0_i32_0 = arith.constant 0 : i32
    %c0_i32_1 = arith.constant 0 : i32
    return %c0_i32, %c0_i32_0 : i32, i32
  }
  func.func @transform_2(%arg0: i32) -> (i32, i32) {
    %c0_i32 = arith.constant 0 : i32
    %c0_i32_0 = arith.constant 0 : i32
    %c0_i32_1 = arith.constant 0 : i32
    return %c0_i32, %c0_i32_0 : i32, i32
  }
  func.func @transform_3(%arg0: i32) -> (i32, i32) {
    %c0_i32 = arith.constant 0 : i32
    %c0_i32_0 = arith.constant 0 : i32
    %c0_i32_1 = arith.constant 0 : i32
    return %c0_i32, %c0_i32_0 : i32, i32
  }
  func.func @transform_4(%arg0: i32) -> (i32, i32) {
    %c0_i32 = arith.constant 0 : i32
    %c0_i32_0 = arith.constant 0 : i32
    %c0_i32_1 = arith.constant 0 : i32
    return %c0_i32, %c0_i32_0 : i32, i32
  }
  func.func @transform_5(%arg0: i32) -> (i32, i32) {
    %c0_i32 = arith.constant 0 : i32
    %c0_i32_0 = arith.constant 0 : i32
    %c0_i32_1 = arith.constant 0 : i32
    return %c0_i32, %c0_i32_0 : i32, i32
  }
  func.func @transform_6(%arg0: i32) -> (i32, i32) {
    %c0_i32 = arith.constant 0 : i32
    %c0_i32_0 = arith.constant 0 : i32
    %c0_i32_1 = arith.constant 0 : i32
    return %c0_i32, %c0_i32_0 : i32, i32
  }
  func.func @transform_7(%arg0: i32) -> (i32, i32) {
    %c0_i32 = arith.constant 0 : i32
    %c0_i32_0 = arith.constant 0 : i32
    return %c0_i32, %arg0 : i32, i32
  }
}

</mosaic_0001>

<llo_original>
// kernel: tpu_custom_call.1
$region0: #{tpu_custom_call.1}
  #allocation0 [shape = 'u32[]', space=smem, size = 0x4, offset = 0x4, fixed_abs, tag = 'smem constant byte address 0x4 - core index']
  #allocation1 [shape = 'u32[72,128]{1,0:T(1,128)}', space=vmem, size = 0x9000, scoped, tag = 'internal scratch']
  #allocation2 [shape = 'f32[1,1]{1,0:T(1,128)S(1)}', space=vmem, size = 0x200, scoped, tag = 'scoped memory for tpu_custom_call.1']
  %s0 = inlined_call_operand.vmem [shape: f32[128,784], index: 0, kind: input, shape index: {}]
  %s1 = inlined_call_operand.vmem [shape: bf16[784,256], index: 1, kind: input, shape index: {}]
  %s2 = inlined_call_operand.vmem [shape: f32[1,256], index: 2, kind: input, shape index: {}]
  %s3 = inlined_call_operand.vmem [shape: bf16[256,256], index: 3, kind: input, shape index: {}]
  %s4 = inlined_call_operand.vmem [shape: f32[1,256], index: 4, kind: input, shape index: {}]
  %s5 = inlined_call_operand.vmem [shape: f32[1,256], index: 5, kind: input, shape index: {}]
  %s6 = inlined_call_operand.<no memory space> [shape: f32[1,1], index: 6, kind: input, shape index: {}]
  %s7 = inlined_call_operand.hbm [shape: f32[1,128], index: 7, kind: output, shape index: {}]
  %s8 = sld [smem:[#allocation0]]
  $region38: #{tpu_custom_call.1} parent=0
    _
  %s10 = ssub.s32 1, %s8
  %s11 = scalar_select 0, %s10, %s8
  %v12 = vstv %s6
  %13 = vst [vmem:[#allocation2] sm:$0x1] %v12
  $region1: #{tpu_custom_call.1} parent=0
    #allocation3 [shape = 'u8[512]{0}', space=vmem, size = 0x400, scoped, tag = 'output window, operand 0, single buffered']
    #allocation4 [shape = 's32[1]{0}', space=sflag, size = 0x4, scoped, tag = 'scoped memory for tpu_custom_call.1']
    %14 = vsyncpa [#allocation4], 0
    // Predicated region
    $region2: #{tpu_custom_call.1} parent=1 // pred_check
      _
    $region3: #{tpu_custom_call.1} parent=1 // pred_check_branch
      %16 = sbr.rel (0) target = $region5
    $region4: #{tpu_custom_call.1} parent=1 // pred_region
      _
    $region5: #{tpu_custom_call.1} parent=1 // pred_fallthru
      _
    // Predicated region
    $region6: #{tpu_custom_call.1} parent=1 // pred_check
      _
    $region7: #{tpu_custom_call.1} parent=1 // pred_check_branch
      %18 = sbr.rel (0) target = $region9
    $region8: #{tpu_custom_call.1} parent=1 // pred_region
      _
    $region9: #{tpu_custom_call.1} parent=1 // pred_fallthru
      _
    // Predicated region
    $region10: #{tpu_custom_call.1} parent=1 // pred_check
      _
    $region11: #{tpu_custom_call.1} parent=1 // pred_check_branch
      %20 = sbr.rel (0) target = $region13
    $region12: #{tpu_custom_call.1} parent=1 // pred_region
      _
    $region13: #{tpu_custom_call.1} parent=1 // pred_fallthru
      _
    // Predicated region
    $region14: #{tpu_custom_call.1} parent=1 // pred_check
      _
    $region15: #{tpu_custom_call.1} parent=1 // pred_check_branch
      %22 = sbr.rel (0) target = $region17
    $region16: #{tpu_custom_call.1} parent=1 // pred_region
      _
    $region17: #{tpu_custom_call.1} parent=1 // pred_fallthru
      _
    // Predicated region
    $region18: #{tpu_custom_call.1} parent=1 // pred_check
      _
    $region19: #{tpu_custom_call.1} parent=1 // pred_check_branch
      %24 = sbr.rel (0) target = $region21
    $region20: #{tpu_custom_call.1} parent=1 // pred_region
      _
    $region21: #{tpu_custom_call.1} parent=1 // pred_fallthru
      _
    // Predicated region
    $region22: #{tpu_custom_call.1} parent=1 // pred_check
      _
    $region23: #{tpu_custom_call.1} parent=1 // pred_check_branch
      %26 = sbr.rel (0) target = $region25
    $region24: #{tpu_custom_call.1} parent=1 // pred_region
      _
    $region25: #{tpu_custom_call.1} parent=1 // pred_fallthru
      _
    // Predicated region
    $region26: #{tpu_custom_call.1} parent=1 // pred_check
      _
    $region27: #{tpu_custom_call.1} parent=1 // pred_check_branch
      %28 = sbr.rel (0) target = $region29
    $region28: #{tpu_custom_call.1} parent=1 // pred_region
      _
    $region29: #{tpu_custom_call.1} parent=1 // pred_fallthru
      _
    %v30 = vld [vmem:[%s0] sm:$0xff]
    %v31 = vld [vmem:[%s0 + $0x8] sm:$0xff]
    %v32 = vld [vmem:[%s0 + $0x10] sm:$0xff]
    %v33 = vld [vmem:[%s0 + $0x18] sm:$0xff]
    %v34 = vld [vmem:[%s0 + $0x20] sm:$0xff]
    %v35 = vld [vmem:[%s0 + $0x28] sm:$0xff]
    %v36 = vld [vmem:[%s0 + $0x30] sm:$0xff]
    %v37 = vld [vmem:[%s0 + $0x38] sm:$0xff]
    %v38 = vld [vmem:[%s0 + $0x40] sm:$0xff]
    %v39 = vld [vmem:[%s0 + $0x48] sm:$0xff]
    %v40 = vld [vmem:[%s0 + $0x50] sm:$0xff]
    %v41 = vld [vmem:[%s0 + $0x58] sm:$0xff]
    %v42 = vld [vmem:[%s0 + $0x60] sm:$0xff]
    %v43 = vld [vmem:[%s0 + $0x68] sm:$0xff]
    %v44 = vld [vmem:[%s0 + $0x70] sm:$0xff]
    %v45 = vld [vmem:[%s0 + $0x78] sm:$0xff]
    %v46 = vld [vmem:[%s0 + $0x80] sm:$0xff]
    %v47 = vld [vmem:[%s0 + $0x88] sm:$0xff]
    %v48 = vld [vmem:[%s0 + $0x90] sm:$0xff]
    %v49 = vld [vmem:[%s0 + $0x98] sm:$0xff]
    %v50 = vld [vmem:[%s0 + $0xa0] sm:$0xff]
    %v51 = vld [vmem:[%s0 + $0xa8] sm:$0xff]
    %v52 = vld [vmem:[%s0 + $0xb0] sm:$0xff]
    %v53 = vld [vmem:[%s0 + $0xb8] sm:$0xff]
    %v54 = vld [vmem:[%s0 + $0xc0] sm:$0xff]
    %v55 = vld [vmem:[%s0 + $0xc8] sm:$0xff]
    %v56 = vld [vmem:[%s0 + $0xd0] sm:$0xff]
    %v57 = vld [vmem:[%s0 + $0xd8] sm:$0xff]
    %v58 = vld [vmem:[%s0 + $0xe0] sm:$0xff]
    %v59 = vld [vmem:[%s0 + $0xe8] sm:$0xff]
    %v60 = vld [vmem:[%s0 + $0xf0] sm:$0xff]
    %v61 = vld [vmem:[%s0 + $0xf8] sm:$0xff]
    %v62 = vld [vmem:[%s0 + $0x100] sm:$0xff]
    %v63 = vld [vmem:[%s0 + $0x108] sm:$0xff]
    %v64 = vld [vmem:[%s0 + $0x110] sm:$0xff]
    %v65 = vld [vmem:[%s0 + $0x118] sm:$0xff]
    %v66 = vld [vmem:[%s0 + $0x120] sm:$0xff]
    %v67 = vld [vmem:[%s0 + $0x128] sm:$0xff]
    %v68 = vld [vmem:[%s0 + $0x130] sm:$0xff]
    %v69 = vld [vmem:[%s0 + $0x138] sm:$0xff]
    %v70 = vld [vmem:[%s0 + $0x140] sm:$0xff]
    %v71 = vld [vmem:[%s0 + $0x148] sm:$0xff]
    %v72 = vld [vmem:[%s0 + $0x150] sm:$0xff]
    %v73 = vld [vmem:[%s0 + $0x158] sm:$0xff]
    %v74 = vld [vmem:[%s0 + $0x160] sm:$0xff]
    %v75 = vld [vmem:[%s0 + $0x168] sm:$0xff]
    %v76 = vld [vmem:[%s0 + $0x170] sm:$0xff]
    %v77 = vld [vmem:[%s0 + $0x178] sm:$0xff]
    %v78 = vld [vmem:[%s0 + $0x180] sm:$0xff]
    %v79 = vld [vmem:[%s0 + $0x188] sm:$0xff]
    %v80 = vld [vmem:[%s0 + $0x190] sm:$0xff]
    %v81 = vld [vmem:[%s0 + $0x198] sm:$0xff]
    %v82 = vld [vmem:[%s0 + $0x1a0] sm:$0xff]
    %v83 = vld [vmem:[%s0 + $0x1a8] sm:$0xff]
    %v84 = vld [vmem:[%s0 + $0x1b0] sm:$0xff]
    %v85 = vld [vmem:[%s0 + $0x1b8] sm:$0xff]
    %v86 = vld [vmem:[%s0 + $0x1c0] sm:$0xff]
    %v87 = vld [vmem:[%s0 + $0x1c8] sm:$0xff]
    %v88 = vld [vmem:[%s0 + $0x1d0] sm:$0xff]
    %v89 = vld [vmem:[%s0 + $0x1d8] sm:$0xff]
    %v90 = vld [vmem:[%s0 + $0x1e0] sm:$0xff]
    %v91 = vld [vmem:[%s0 + $0x1e8] sm:$0xff]
    %v92 = vld [vmem:[%s0 + $0x1f0] sm:$0xff]
    %v93 = vld [vmem:[%s0 + $0x1f8] sm:$0xff]
    %v94 = vld [vmem:[%s0 + $0x200] sm:$0xff]
    %v95 = vld [vmem:[%s0 + $0x208] sm:$0xff]
    %v96 = vld [vmem:[%s0 + $0x210] sm:$0xff]
    %v97 = vld [vmem:[%s0 + $0x218] sm:$0xff]
    %v98 = vld [vmem:[%s0 + $0x220] sm:$0xff]
    %v99 = vld [vmem:[%s0 + $0x228] sm:$0xff]
    %v100 = vld [vmem:[%s0 + $0x230] sm:$0xff]
    %v101 = vld [vmem:[%s0 + $0x238] sm:$0xff]
    %v102 = vld [vmem:[%s0 + $0x240] sm:$0xff]
    %v103 = vld [vmem:[%s0 + $0x248] sm:$0xff]
    %v104 = vld [vmem:[%s0 + $0x250] sm:$0xff]
    %v105 = vld [vmem:[%s0 + $0x258] sm:$0xff]
    %v106 = vld [vmem:[%s0 + $0x260] sm:$0xff]
    %v107 = vld [vmem:[%s0 + $0x268] sm:$0xff]
    %v108 = vld [vmem:[%s0 + $0x270] sm:$0xff]
    %v109 = vld [vmem:[%s0 + $0x278] sm:$0xff]
    %v110 = vld [vmem:[%s0 + $0x280] sm:$0xff]
    %v111 = vld [vmem:[%s0 + $0x288] sm:$0xff]
    %v112 = vld [vmem:[%s0 + $0x290] sm:$0xff]
    %v113 = vld [vmem:[%s0 + $0x298] sm:$0xff]
    %v114 = vld [vmem:[%s0 + $0x2a0] sm:$0xff]
    %v115 = vld [vmem:[%s0 + $0x2a8] sm:$0xff]
    %v116 = vld [vmem:[%s0 + $0x2b0] sm:$0xff]
    %v117 = vld [vmem:[%s0 + $0x2b8] sm:$0xff]
    %v118 = vld [vmem:[%s0 + $0x2c0] sm:$0xff]
    %v119 = vld [vmem:[%s0 + $0x2c8] sm:$0xff]
    %v120 = vld [vmem:[%s0 + $0x2d0] sm:$0xff]
    %v121 = vld [vmem:[%s0 + $0x2d8] sm:$0xff]
    %v122 = vld [vmem:[%s0 + $0x2e0] sm:$0xff]
    %v123 = vld [vmem:[%s0 + $0x2e8] sm:$0xff]
    %v124 = vld [vmem:[%s0 + $0x2f0] sm:$0xff]
    %v125 = vld [vmem:[%s0 + $0x2f8] sm:$0xff]
    %v126 = vld [vmem:[%s0 + $0x300] sm:$0xff]
    %v127 = vld [vmem:[%s0 + $0x308] sm:$0xff]
    %v128 = vld [vmem:[%s0 + $0x310] sm:$0xff]
    %v129 = vld [vmem:[%s0 + $0x318] sm:$0xff]
    %v130 = vld [vmem:[%s0 + $0x320] sm:$0xff]
    %v131 = vld [vmem:[%s0 + $0x328] sm:$0xff]
    %v132 = vld [vmem:[%s0 + $0x330] sm:$0xff]
    %v133 = vld [vmem:[%s0 + $0x338] sm:$0xff]
    %v134 = vld [vmem:[%s0 + $0x340] sm:$0xff]
    %v135 = vld [vmem:[%s0 + $0x348] sm:$0xff]
    %v136 = vld [vmem:[%s0 + $0x350] sm:$0xff]
    %v137 = vld [vmem:[%s0 + $0x358] sm:$0xff]
    %v138 = vld [vmem:[%s0 + $0x360] sm:$0xff]
    %v139 = vld [vmem:[%s0 + $0x368] sm:$0xff]
    %v140 = vld [vmem:[%s0 + $0x370] sm:$0xff]
    %v141 = vld [vmem:[%s0 + $0x378] sm:$0xff]
    %v142 = vpack.c.bf16 %v37, %v30
    %v143 = vpack.c.bf16 %v38, %v31
    %v144 = vpack.c.bf16 %v39, %v32
    %v145 = vpack.c.bf16 %v40, %v33
    %v146 = vpack.c.bf16 %v41, %v34
    %v147 = vpack.c.bf16 %v42, %v35
    %v148 = vpack.c.bf16 %v43, %v36
    %v149 = vpack.c.bf16 %v51, %v44
    %v150 = vpack.c.bf16 %v52, %v45
    %v151 = vpack.c.bf16 %v53, %v46
    %v152 = vpack.c.bf16 %v54, %v47
    %v153 = vpack.c.bf16 %v55, %v48
    %v154 = vpack.c.bf16 %v56, %v49
    %v155 = vpack.c.bf16 %v57, %v50
    %v156 = vpack.c.bf16 %v65, %v58
    %v157 = vpack.c.bf16 %v66, %v59
    %v158 = vpack.c.bf16 %v67, %v60
    %v159 = vpack.c.bf16 %v68, %v61
    %v160 = vpack.c.bf16 %v69, %v62
    %v161 = vpack.c.bf16 %v70, %v63
    %v162 = vpack.c.bf16 %v71, %v64
    %v163 = vpack.c.bf16 %v79, %v72
    %v164 = vpack.c.bf16 %v80, %v73
    %v165 = vpack.c.bf16 %v81, %v74
    %v166 = vpack.c.bf16 %v82, %v75
    %v167 = vpack.c.bf16 %v83, %v76
    %v168 = vpack.c.bf16 %v84, %v77
    %v169 = vpack.c.bf16 %v85, %v78
    %v170 = vpack.c.bf16 %v93, %v86
    %v171 = vpack.c.bf16 %v94, %v87
    %v172 = vpack.c.bf16 %v95, %v88
    %v173 = vpack.c.bf16 %v96, %v89
    %v174 = vpack.c.bf16 %v97, %v90
    %v175 = vpack.c.bf16 %v98, %v91
    %v176 = vpack.c.bf16 %v99, %v92
    %v177 = vpack.c.bf16 %v107, %v100
    %v178 = vpack.c.bf16 %v108, %v101
    %v179 = vpack.c.bf16 %v109, %v102
    %v180 = vpack.c.bf16 %v110, %v103
    %v181 = vpack.c.bf16 %v111, %v104
    %v182 = vpack.c.bf16 %v112, %v105
    %v183 = vpack.c.bf16 %v113, %v106
    %v184 = vpack.c.bf16 %v121, %v114
    %v185 = vpack.c.bf16 %v122, %v115
    %v186 = vpack.c.bf16 %v123, %v116
    %v187 = vpack.c.bf16 %v124, %v117
    %v188 = vpack.c.bf16 %v125, %v118
    %v189 = vpack.c.bf16 %v126, %v119
    %v190 = vpack.c.bf16 %v127, %v120
    %v191 = vpack.c.bf16 %v135, %v128
    %v192 = vpack.c.bf16 %v136, %v129
    %v193 = vpack.c.bf16 %v137, %v130
    %v194 = vpack.c.bf16 %v138, %v131
    %v195 = vpack.c.bf16 %v139, %v132
    %v196 = vpack.c.bf16 %v140, %v133
    %v197 = vpack.c.bf16 %v141, %v134
    %v198 = vld [vmem:[%s1] sm:$0xff]
    %v199 = vld [vmem:[%s1 + $0x8] sm:$0xff]
    %v200 = vld [vmem:[%s1 + $0x10] sm:$0xff]
    %v201 = vld [vmem:[%s1 + $0x18] sm:$0xff]
    %v202 = vld [vmem:[%s1 + $0x20] sm:$0xff]
    %v203 = vld [vmem:[%s1 + $0x28] sm:$0xff]
    %v204 = vld [vmem:[%s1 + $0x30] sm:$0xff]
    %v205 = vld [vmem:[%s1 + $0x38] sm:$0xff]
    %v206 = vld [vmem:[%s1 + $0x40] sm:$0xff]
    %v207 = vld [vmem:[%s1 + $0x48] sm:$0xff]
    %v208 = vld [vmem:[%s1 + $0x50] sm:$0xff]
    %v209 = vld [vmem:[%s1 + $0x58] sm:$0xff]
    %v210 = vld [vmem:[%s1 + $0x60] sm:$0xff]
    %v211 = vld [vmem:[%s1 + $0x68] sm:$0xff]
    %v212 = vld [vmem:[%s1 + $0x70] sm:$0xff]
    %v213 = vld [vmem:[%s1 + $0x78] sm:$0xff]
    %v214 = vld [vmem:[%s1 + $0x80] sm:$0xff]
    %v215 = vld [vmem:[%s1 + $0x88] sm:$0xff]
    %v216 = vld [vmem:[%s1 + $0x90] sm:$0xff]
    %v217 = vld [vmem:[%s1 + $0x98] sm:$0xff]
    %v218 = vld [vmem:[%s1 + $0xa0] sm:$0xff]
    %v219 = vld [vmem:[%s1 + $0xa8] sm:$0xff]
    %v220 = vld [vmem:[%s1 + $0xb0] sm:$0xff]
    %v221 = vld [vmem:[%s1 + $0xb8] sm:$0xff]
    %v222 = vld [vmem:[%s1 + $0xc0] sm:$0xff]
    %v223 = vld [vmem:[%s1 + $0xc8] sm:$0xff]
    %v224 = vld [vmem:[%s1 + $0xd0] sm:$0xff]
    %v225 = vld [vmem:[%s1 + $0xd8] sm:$0xff]
    %v226 = vld [vmem:[%s1 + $0xe0] sm:$0xff]
    %v227 = vld [vmem:[%s1 + $0xe8] sm:$0xff]
    %v228 = vld [vmem:[%s1 + $0xf0] sm:$0xff]
    %v229 = vld [vmem:[%s1 + $0xf8] sm:$0xff]
    %v230 = vld [vmem:[%s1 + $0x100] sm:$0xff]
    %v231 = vld [vmem:[%s1 + $0x108] sm:$0xff]
    %v232 = vld [vmem:[%s1 + $0x110] sm:$0xff]
    %v233 = vld [vmem:[%s1 + $0x118] sm:$0xff]
    %v234 = vld [vmem:[%s1 + $0x120] sm:$0xff]
    %v235 = vld [vmem:[%s1 + $0x128] sm:$0xff]
    %v236 = vld [vmem:[%s1 + $0x130] sm:$0xff]
    %v237 = vld [vmem:[%s1 + $0x138] sm:$0xff]
    %v238 = vld [vmem:[%s1 + $0x140] sm:$0xff]
    %v239 = vld [vmem:[%s1 + $0x148] sm:$0xff]
    %v240 = vld [vmem:[%s1 + $0x150] sm:$0xff]
    %v241 = vld [vmem:[%s1 + $0x158] sm:$0xff]
    %v242 = vld [vmem:[%s1 + $0x160] sm:$0xff]
    %v243 = vld [vmem:[%s1 + $0x168] sm:$0xff]
    %v244 = vld [vmem:[%s1 + $0x170] sm:$0xff]
    %v245 = vld [vmem:[%s1 + $0x178] sm:$0xff]
    %v246 = vld [vmem:[%s1 + $0x180] sm:$0xff]
    %v247 = vld [vmem:[%s1 + $0x188] sm:$0xff]
    %v248 = vld [vmem:[%s1 + $0x190] sm:$0xff]
    %v249 = vld [vmem:[%s1 + $0x198] sm:$0xff]
    %v250 = vld [vmem:[%s1 + $0x1a0] sm:$0xff]
    %v251 = vld [vmem:[%s1 + $0x1a8] sm:$0xff]
    %v252 = vld [vmem:[%s1 + $0x1b0] sm:$0xff]
    %v253 = vld [vmem:[%s1 + $0x1b8] sm:$0xff]
    %v254 = vld [vmem:[%s1 + $0x1c0] sm:$0xff]
    %v255 = vld [vmem:[%s1 + $0x1c8] sm:$0xff]
    %v256 = vld [vmem:[%s1 + $0x1d0] sm:$0xff]
    %v257 = vld [vmem:[%s1 + $0x1d8] sm:$0xff]
    %v258 = vld [vmem:[%s1 + $0x1e0] sm:$0xff]
    %v259 = vld [vmem:[%s1 + $0x1e8] sm:$0xff]
    %v260 = vld [vmem:[%s1 + $0x1f0] sm:$0xff]
    %v261 = vld [vmem:[%s1 + $0x1f8] sm:$0xff]
    %v262 = vld [vmem:[%s1 + $0x200] sm:$0xff]
    %v263 = vld [vmem:[%s1 + $0x208] sm:$0xff]
    %v264 = vld [vmem:[%s1 + $0x210] sm:$0xff]
    %v265 = vld [vmem:[%s1 + $0x218] sm:$0xff]
    %v266 = vld [vmem:[%s1 + $0x220] sm:$0xff]
    %v267 = vld [vmem:[%s1 + $0x228] sm:$0xff]
    %v268 = vld [vmem:[%s1 + $0x230] sm:$0xff]
    %v269 = vld [vmem:[%s1 + $0x238] sm:$0xff]
    %v270 = vld [vmem:[%s1 + $0x240] sm:$0xff]
    %v271 = vld [vmem:[%s1 + $0x248] sm:$0xff]
    %v272 = vld [vmem:[%s1 + $0x250] sm:$0xff]
    %v273 = vld [vmem:[%s1 + $0x258] sm:$0xff]
    %v274 = vld [vmem:[%s1 + $0x260] sm:$0xff]
    %v275 = vld [vmem:[%s1 + $0x268] sm:$0xff]
    %v276 = vld [vmem:[%s1 + $0x270] sm:$0xff]
    %v277 = vld [vmem:[%s1 + $0x278] sm:$0xff]
    %v278 = vld [vmem:[%s1 + $0x280] sm:$0xff]
    %v279 = vld [vmem:[%s1 + $0x288] sm:$0xff]
    %v280 = vld [vmem:[%s1 + $0x290] sm:$0xff]
    %v281 = vld [vmem:[%s1 + $0x298] sm:$0xff]
    %v282 = vld [vmem:[%s1 + $0x2a0] sm:$0xff]
    %v283 = vld [vmem:[%s1 + $0x2a8] sm:$0xff]
    %v284 = vld [vmem:[%s1 + $0x2b0] sm:$0xff]
    %v285 = vld [vmem:[%s1 + $0x2b8] sm:$0xff]
    %v286 = vld [vmem:[%s1 + $0x2c0] sm:$0xff]
    %v287 = vld [vmem:[%s1 + $0x2c8] sm:$0xff]
    %v288 = vld [vmem:[%s1 + $0x2d0] sm:$0xff]
    %v289 = vld [vmem:[%s1 + $0x2d8] sm:$0xff]
    %v290 = vld [vmem:[%s1 + $0x2e0] sm:$0xff]
    %v291 = vld [vmem:[%s1 + $0x2e8] sm:$0xff]
    %v292 = vld [vmem:[%s1 + $0x2f0] sm:$0xff]
    %v293 = vld [vmem:[%s1 + $0x2f8] sm:$0xff]
    %v294 = vld [vmem:[%s1 + $0x300] sm:$0xff]
    %v295 = vld [vmem:[%s1 + $0x308] sm:$0xff]
    %v296 = vld [vmem:[%s2] sm:$0x3]
    %v298 = vperm.slane %v296, 0
    %v299 = vperm.slane %v296, 1
    %v400 = vunpack.c.l.b16 %v198
    %v401 = vunpack.c.h.b16 %v198
    %v402 = vunpack.c.l.b16 %v199
    %v403 = vunpack.c.h.b16 %v199
    %v404 = vunpack.c.l.b16 %v200
    %v405 = vunpack.c.h.b16 %v200
    %v406 = vunpack.c.l.b16 %v201
    %v407 = vunpack.c.h.b16 %v201
    %v408 = vunpack.c.l.b16 %v202
    %v409 = vunpack.c.h.b16 %v202
    %v410 = vunpack.c.l.b16 %v203
    %v411 = vunpack.c.h.b16 %v203
    %v412 = vunpack.c.l.b16 %v204
    %v413 = vunpack.c.h.b16 %v204
    %v414 = vunpack.c.l.b16 %v205
    %v415 = vunpack.c.h.b16 %v205
    %v416 = vunpack.c.l.b16 %v206
    %v417 = vunpack.c.h.b16 %v206
    %v418 = vunpack.c.l.b16 %v207
    %v419 = vunpack.c.h.b16 %v207
    %v420 = vunpack.c.l.b16 %v208
    %v421 = vunpack.c.h.b16 %v208
    %v422 = vunpack.c.l.b16 %v209
    %v423 = vunpack.c.h.b16 %v209
    %v424 = vunpack.c.l.b16 %v210
    %v425 = vunpack.c.h.b16 %v210
    %v426 = vunpack.c.l.b16 %v211
    %v427 = vunpack.c.h.b16 %v211
    %v428 = vunpack.c.l.b16 %v212
    %v429 = vunpack.c.h.b16 %v212
    %v430 = vunpack.c.l.b16 %v213
    %v431 = vunpack.c.h.b16 %v213
    %v432 = vunpack.c.l.b16 %v214
    %v433 = vunpack.c.h.b16 %v214
    %v434 = vunpack.c.l.b16 %v215
    %v435 = vunpack.c.h.b16 %v215
    %v436 = vunpack.c.l.b16 %v216
    %v437 = vunpack.c.h.b16 %v216
    %v438 = vunpack.c.l.b16 %v217
    %v439 = vunpack.c.h.b16 %v217
    %v440 = vunpack.c.l.b16 %v218
    %v441 = vunpack.c.h.b16 %v218
    %v442 = vunpack.c.l.b16 %v219
    %v443 = vunpack.c.h.b16 %v219
    %v444 = vunpack.c.l.b16 %v220
    %v445 = vunpack.c.h.b16 %v220
    %v446 = vunpack.c.l.b16 %v221
    %v447 = vunpack.c.h.b16 %v221
    %v448 = vunpack.c.l.b16 %v222
    %v449 = vunpack.c.h.b16 %v222
    %v450 = vunpack.c.l.b16 %v223
    %v451 = vunpack.c.h.b16 %v223
    %v452 = vunpack.c.l.b16 %v224
    %v453 = vunpack.c.h.b16 %v224
    %v454 = vunpack.c.l.b16 %v225
    %v455 = vunpack.c.h.b16 %v225
    %v456 = vunpack.c.l.b16 %v226
    %v457 = vunpack.c.h.b16 %v226
    %v458 = vunpack.c.l.b16 %v227
    %v459 = vunpack.c.h.b16 %v227
    %v460 = vunpack.c.l.b16 %v228
    %v461 = vunpack.c.h.b16 %v228
    %v462 = vunpack.c.l.b16 %v229
    %v463 = vunpack.c.h.b16 %v229
    %v464 = vunpack.c.l.b16 %v230
    %v465 = vunpack.c.h.b16 %v230
    %v466 = vunpack.c.l.b16 %v231
    %v467 = vunpack.c.h.b16 %v231
    %v468 = vunpack.c.l.b16 %v232
    %v469 = vunpack.c.h.b16 %v232
    %v470 = vunpack.c.l.b16 %v233
    %v471 = vunpack.c.h.b16 %v233
    %v472 = vunpack.c.l.b16 %v234
    %v473 = vunpack.c.h.b16 %v234
    %v474 = vunpack.c.l.b16 %v235
    %v475 = vunpack.c.h.b16 %v235
    %v476 = vunpack.c.l.b16 %v236
    %v477 = vunpack.c.h.b16 %v236
    %v478 = vunpack.c.l.b16 %v237
    %v479 = vunpack.c.h.b16 %v237
    %v480 = vunpack.c.l.b16 %v238
    %v481 = vunpack.c.h.b16 %v238
    %v482 = vunpack.c.l.b16 %v239
    %v483 = vunpack.c.h.b16 %v239
    %v484 = vunpack.c.l.b16 %v240
    %v485 = vunpack.c.h.b16 %v240
    %v486 = vunpack.c.l.b16 %v241
    %v487 = vunpack.c.h.b16 %v241
    %v488 = vunpack.c.l.b16 %v242
    %v489 = vunpack.c.h.b16 %v242
    %v490 = vunpack.c.l.b16 %v243
    %v491 = vunpack.c.h.b16 %v243
    %v492 = vunpack.c.l.b16 %v244
    %v493 = vunpack.c.h.b16 %v244
    %v494 = vunpack.c.l.b16 %v245
    %v495 = vunpack.c.h.b16 %v245
    %v496 = vunpack.c.l.b16 %v246
    %v497 = vunpack.c.h.b16 %v246
    %v498 = vunpack.c.l.b16 %v247
    %v499 = vunpack.c.h.b16 %v247
    %v500 = vunpack.c.l.b16 %v248
    %v501 = vunpack.c.h.b16 %v248
    %v502 = vunpack.c.l.b16 %v249
    %v503 = vunpack.c.h.b16 %v249
    %v504 = vunpack.c.l.b16 %v250
    %v505 = vunpack.c.h.b16 %v250
    %v506 = vunpack.c.l.b16 %v251
    %v507 = vunpack.c.h.b16 %v251
    %v508 = vunpack.c.l.b16 %v252
    %v509 = vunpack.c.h.b16 %v252
    %v510 = vunpack.c.l.b16 %v253
    %v511 = vunpack.c.h.b16 %v253
    %v512 = vunpack.c.l.b16 %v254
    %v513 = vunpack.c.h.b16 %v254
    %v514 = vunpack.c.l.b16 %v255
    %v515 = vunpack.c.h.b16 %v255
    %v516 = vunpack.c.l.b16 %v256
    %v517 = vunpack.c.h.b16 %v256
    %v518 = vunpack.c.l.b16 %v257
    %v519 = vunpack.c.h.b16 %v257
    %v520 = vunpack.c.l.b16 %v258
    %v521 = vunpack.c.h.b16 %v258
    %v522 = vunpack.c.l.b16 %v259
    %v523 = vunpack.c.h.b16 %v259
    %v524 = vunpack.c.l.b16 %v260
    %v525 = vunpack.c.h.b16 %v260
    %v526 = vunpack.c.l.b16 %v261
    %v527 = vunpack.c.h.b16 %v261
    %v528 = vunpack.c.l.b16 %v262
    %v529 = vunpack.c.h.b16 %v262
    %v530 = vunpack.c.l.b16 %v263
    %v531 = vunpack.c.h.b16 %v263
    %v532 = vunpack.c.l.b16 %v264
    %v533 = vunpack.c.h.b16 %v264
    %v534 = vunpack.c.l.b16 %v265
    %v535 = vunpack.c.h.b16 %v265
    %v536 = vunpack.c.l.b16 %v266
    %v537 = vunpack.c.h.b16 %v266
    %v538 = vunpack.c.l.b16 %v267
    %v539 = vunpack.c.h.b16 %v267
    %v540 = vunpack.c.l.b16 %v268
    %v541 = vunpack.c.h.b16 %v268
    %v542 = vunpack.c.l.b16 %v269
    %v543 = vunpack.c.h.b16 %v269
    %v544 = vunpack.c.l.b16 %v270
    %v545 = vunpack.c.h.b16 %v270
    %v546 = vunpack.c.l.b16 %v271
    %v547 = vunpack.c.h.b16 %v271
    %v548 = vunpack.c.l.b16 %v272
    %v549 = vunpack.c.h.b16 %v272
    %v550 = vunpack.c.l.b16 %v273
    %v551 = vunpack.c.h.b16 %v273
    %v552 = vunpack.c.l.b16 %v274
    %v553 = vunpack.c.h.b16 %v274
    %v554 = vunpack.c.l.b16 %v275
    %v555 = vunpack.c.h.b16 %v275
    %v556 = vunpack.c.l.b16 %v276
    %v557 = vunpack.c.h.b16 %v276
    %v558 = vunpack.c.l.b16 %v277
    %v559 = vunpack.c.h.b16 %v277
    %v560 = vunpack.c.l.b16 %v278
    %v561 = vunpack.c.h.b16 %v278
    %v562 = vunpack.c.l.b16 %v279
    %v563 = vunpack.c.h.b16 %v279
    %v564 = vunpack.c.l.b16 %v280
    %v565 = vunpack.c.h.b16 %v280
    %v566 = vunpack.c.l.b16 %v281
    %v567 = vunpack.c.h.b16 %v281
    %v568 = vunpack.c.l.b16 %v282
    %v569 = vunpack.c.h.b16 %v282
    %v570 = vunpack.c.l.b16 %v283
    %v571 = vunpack.c.h.b16 %v283
    %v572 = vunpack.c.l.b16 %v284
    %v573 = vunpack.c.h.b16 %v284
    %v574 = vunpack.c.l.b16 %v285
    %v575 = vunpack.c.h.b16 %v285
    %v576 = vunpack.c.l.b16 %v286
    %v577 = vunpack.c.h.b16 %v286
    %v578 = vunpack.c.l.b16 %v287
    %v579 = vunpack.c.h.b16 %v287
    %v580 = vunpack.c.l.b16 %v288
    %v581 = vunpack.c.h.b16 %v288
    %v582 = vunpack.c.l.b16 %v289
    %v583 = vunpack.c.h.b16 %v289
    %v584 = vunpack.c.l.b16 %v290
    %v585 = vunpack.c.h.b16 %v290
    %v586 = vunpack.c.l.b16 %v291
    %v587 = vunpack.c.h.b16 %v291
    %v588 = vunpack.c.l.b16 %v292
    %v589 = vunpack.c.h.b16 %v292
    %v590 = vunpack.c.l.b16 %v293
    %v591 = vunpack.c.h.b16 %v293
    %v592 = vunpack.c.l.b16 %v294
    %v593 = vunpack.c.h.b16 %v294
    %v594 = vunpack.c.l.b16 %v295
    %v595 = vunpack.c.h.b16 %v295
    %v596 = vpack.c.b16 %v402, %v400
    %v597 = vpack.c.b16 %v403, %v401
    %v598 = vpack.c.b16 %v406, %v404
    %v599 = vpack.c.b16 %v407, %v405
    %v600 = vpack.c.b16 %v410, %v408
    %v601 = vpack.c.b16 %v411, %v409
    %v602 = vpack.c.b16 %v414, %v412
    %v603 = vpack.c.b16 %v415, %v413
    %v604 = vpack.c.b16 %v418, %v416
    %v605 = vpack.c.b16 %v419, %v417
    %v606 = vpack.c.b16 %v422, %v420
    %v607 = vpack.c.b16 %v423, %v421
    %v608 = vpack.c.b16 %v426, %v424
    %v609 = vpack.c.b16 %v427, %v425
    %v610 = vpack.c.b16 %v430, %v428
    %v611 = vpack.c.b16 %v431, %v429
    %v612 = vpack.c.b16 %v434, %v432
    %v613 = vpack.c.b16 %v435, %v433
    %v614 = vpack.c.b16 %v438, %v436
    %v615 = vpack.c.b16 %v439, %v437
    %v616 = vpack.c.b16 %v442, %v440
    %v617 = vpack.c.b16 %v443, %v441
    %v618 = vpack.c.b16 %v446, %v444
    %v619 = vpack.c.b16 %v447, %v445
    %v620 = vpack.c.b16 %v450, %v448
    %v621 = vpack.c.b16 %v451, %v449
    %v622 = vpack.c.b16 %v454, %v452
    %v623 = vpack.c.b16 %v455, %v453
    %v624 = vpack.c.b16 %v458, %v456
    %v625 = vpack.c.b16 %v459, %v457
    %v626 = vpack.c.b16 %v462, %v460
    %v627 = vpack.c.b16 %v463, %v461
    %v628 = vpack.c.b16 %v466, %v464
    %v629 = vpack.c.b16 %v467, %v465
    %v630 = vpack.c.b16 %v470, %v468
    %v631 = vpack.c.b16 %v471, %v469
    %v632 = vpack.c.b16 %v474, %v472
    %v633 = vpack.c.b16 %v475, %v473
    %v634 = vpack.c.b16 %v478, %v476
    %v635 = vpack.c.b16 %v479, %v477
    %v636 = vpack.c.b16 %v482, %v480
    %v637 = vpack.c.b16 %v483, %v481
    %v638 = vpack.c.b16 %v486, %v484
    %v639 = vpack.c.b16 %v487, %v485
    %v640 = vpack.c.b16 %v490, %v488
    %v641 = vpack.c.b16 %v491, %v489
    %v642 = vpack.c.b16 %v494, %v492
    %v643 = vpack.c.b16 %v495, %v493
    %v644 = vpack.c.b16 %v498, %v496
    %v645 = vpack.c.b16 %v499, %v497
    %v646 = vpack.c.b16 %v502, %v500
    %v647 = vpack.c.b16 %v503, %v501
    %v648 = vpack.c.b16 %v506, %v504
    %v649 = vpack.c.b16 %v507, %v505
    %v650 = vpack.c.b16 %v510, %v508
    %v651 = vpack.c.b16 %v511, %v509
    %v652 = vpack.c.b16 %v514, %v512
    %v653 = vpack.c.b16 %v515, %v513
    %v654 = vpack.c.b16 %v518, %v516
    %v655 = vpack.c.b16 %v519, %v517
    %v656 = vpack.c.b16 %v522, %v520
    %v657 = vpack.c.b16 %v523, %v521
    %v658 = vpack.c.b16 %v526, %v524
    %v659 = vpack.c.b16 %v527, %v525
    %v660 = vpack.c.b16 %v530, %v528
    %v661 = vpack.c.b16 %v531, %v529
    %v662 = vpack.c.b16 %v534, %v532
    %v663 = vpack.c.b16 %v535, %v533
    %v664 = vpack.c.b16 %v538, %v536
    %v665 = vpack.c.b16 %v539, %v537
    %v666 = vpack.c.b16 %v542, %v540
    %v667 = vpack.c.b16 %v543, %v541
    %v668 = vpack.c.b16 %v546, %v544
    %v669 = vpack.c.b16 %v547, %v545
    %v670 = vpack.c.b16 %v550, %v548
    %v671 = vpack.c.b16 %v551, %v549
    %v672 = vpack.c.b16 %v554, %v552
    %v673 = vpack.c.b16 %v555, %v553
    %v674 = vpack.c.b16 %v558, %v556
    %v675 = vpack.c.b16 %v559, %v557
    %v676 = vpack.c.b16 %v562, %v560
    %v677 = vpack.c.b16 %v563, %v561
    %v678 = vpack.c.b16 %v566, %v564
    %v679 = vpack.c.b16 %v567, %v565
    %v680 = vpack.c.b16 %v570, %v568
    %v681 = vpack.c.b16 %v571, %v569
    %v682 = vpack.c.b16 %v574, %v572
    %v683 = vpack.c.b16 %v575, %v573
    %v684 = vpack.c.b16 %v578, %v576
    %v685 = vpack.c.b16 %v579, %v577
    %v686 = vpack.c.b16 %v582, %v580
    %v687 = vpack.c.b16 %v583, %v581
    %v688 = vpack.c.b16 %v586, %v584
    %v689 = vpack.c.b16 %v587, %v585
    %v690 = vpack.c.b16 %v590, %v588
    %v691 = vpack.c.b16 %v591, %v589
    %v692 = vpack.c.b16 %v594, %v592
    %v693 = vpack.c.b16 %v595, %v593
    %vm792 = vcmask 130048
    %v794 = vsel %vm792, %v148, 0
    %v797 = vsel %vm792, %v155, 0
    %v800 = vsel %vm792, %v162, 0
    %v803 = vsel %vm792, %v169, 0
    %v806 = vsel %vm792, %v176, 0
    %v809 = vsel %vm792, %v183, 0
    %v812 = vsel %vm792, %v190, 0
    %v815 = vsel %vm792, %v197, 0
    %817 = vmatpush.bf16.msra.mxu0 %v610
    %818 = vmatpush.bf16.msra.mxu0 %v608
    %819 = vmatpush.bf16.msra.mxu0 %v606
    %820 = vmatpush.bf16.msra.mxu0 %v604
    %821 = vmatpush.bf16.msra.mxu0 %v602
    %822 = vmatpush.bf16.msra.mxu0 %v600
    %823 = vmatpush.bf16.msra.mxu0 %v598
    %824 = vmatpush.bf16.msra.mxu0 %v596
    %825 = vmatmul.bf16.gmra.mxu0 %v142
    %v826 = vpop.f32.mrf.mxu0
    %v827 = vadd.f32 %v298, %v826
    %v828 = vpop.f32.mrf.mxu0
    %v829 = vadd.f32 %v298, %v828
    %830 = vmatmul.bf16.gmra.mxu0 %v149
    %v831 = vpop.f32.mrf.mxu0
    %v832 = vadd.f32 %v298, %v831
    %v833 = vpop.f32.mrf.mxu0
    %v834 = vadd.f32 %v298, %v833
    %835 = vmatmul.bf16.gmra.mxu0 %v156
    %v836 = vpop.f32.mrf.mxu0
    %v837 = vadd.f32 %v298, %v836
    %v838 = vpop.f32.mrf.mxu0
    %v839 = vadd.f32 %v298, %v838
    %840 = vmatmul.bf16.gmra.mxu0 %v163
    %v841 = vpop.f32.mrf.mxu0
    %v842 = vadd.f32 %v298, %v841
    %v843 = vpop.f32.mrf.mxu0
    %v844 = vadd.f32 %v298, %v843
    %845 = vmatmul.bf16.gmra.mxu0 %v170
    %v846 = vpop.f32.mrf.mxu0
    %v847 = vadd.f32 %v298, %v846
    %v848 = vpop.f32.mrf.mxu0
    %v849 = vadd.f32 %v298, %v848
    %850 = vmatmul.bf16.gmra.mxu0 %v177
    %v851 = vpop.f32.mrf.mxu0
    %v852 = vadd.f32 %v298, %v851
    %v853 = vpop.f32.mrf.mxu0
    %v854 = vadd.f32 %v298, %v853
    %855 = vmatmul.bf16.gmra.mxu0 %v184
    %v856 = vpop.f32.mrf.mxu0
    %v857 = vadd.f32 %v298, %v856
    %v858 = vpop.f32.mrf.mxu0
    %v859 = vadd.f32 %v298, %v858
    %860 = vmatmul.bf16.gmra.mxu0 %v191
    %v861 = vpop.f32.mrf.mxu0
    %v862 = vadd.f32 %v298, %v861
    %v863 = vpop.f32.mrf.mxu0
    %v864 = vadd.f32 %v298, %v863
    %865 = vdwg.mxu0
    %866 = vmatpush.bf16.msra.mxu0 %v626
    %867 = vmatpush.bf16.msra.mxu0 %v624
    %868 = vmatpush.bf16.msra.mxu0 %v622
    %869 = vmatpush.bf16.msra.mxu0 %v620
    %870 = vmatpush.bf16.msra.mxu0 %v618
    %871 = vmatpush.bf16.msra.mxu0 %v616
    %872 = vmatpush.bf16.msra.mxu0 %v614
    %873 = vmatpush.bf16.msra.mxu0 %v612
    %874 = vmatmul.bf16.gmra.mxu0 %v143
    %v875 = vpop.f32.mrf.mxu0
    %v876 = vadd.f32 %v827, %v875
    %v877 = vpop.f32.mrf.mxu0
    %v878 = vadd.f32 %v829, %v877
    %879 = vmatmul.bf16.gmra.mxu0 %v150
    %v880 = vpop.f32.mrf.mxu0
    %v881 = vadd.f32 %v832, %v880
    %v882 = vpop.f32.mrf.mxu0
    %v883 = vadd.f32 %v834, %v882
    %884 = vmatmul.bf16.gmra.mxu0 %v157
    %v885 = vpop.f32.mrf.mxu0
    %v886 = vadd.f32 %v837, %v885
    %v887 = vpop.f32.mrf.mxu0
    %v888 = vadd.f32 %v839, %v887
    %889 = vmatmul.bf16.gmra.mxu0 %v164
    %v890 = vpop.f32.mrf.mxu0
    %v891 = vadd.f32 %v842, %v890
    %v892 = vpop.f32.mrf.mxu0
    %v893 = vadd.f32 %v844, %v892
    %894 = vmatmul.bf16.gmra.mxu0 %v171
    %v895 = vpop.f32.mrf.mxu0
    %v896 = vadd.f32 %v847, %v895
    %v897 = vpop.f32.mrf.mxu0
    %v898 = vadd.f32 %v849, %v897
    %899 = vmatmul.bf16.gmra.mxu0 %v178
    %v900 = vpop.f32.mrf.mxu0
    %v901 = vadd.f32 %v852, %v900
    %v902 = vpop.f32.mrf.mxu0
    %v903 = vadd.f32 %v854, %v902
    %904 = vmatmul.bf16.gmra.mxu0 %v185
    %v905 = vpop.f32.mrf.mxu0
    %v906 = vadd.f32 %v857, %v905
    %v907 = vpop.f32.mrf.mxu0
    %v908 = vadd.f32 %v859, %v907
    %909 = vmatmul.bf16.gmra.mxu0 %v192
    %v910 = vpop.f32.mrf.mxu0
    %v911 = vadd.f32 %v862, %v910
    %v912 = vpop.f32.mrf.mxu0
    %v913 = vadd.f32 %v864, %v912
    %914 = vdwg.mxu0
    %915 = vmatpush.bf16.msra.mxu0 %v642
    %916 = vmatpush.bf16.msra.mxu0 %v640
    %917 = vmatpush.bf16.msra.mxu0 %v638
    %918 = vmatpush.bf16.msra.mxu0 %v636
    %919 = vmatpush.bf16.msra.mxu0 %v634
    %920 = vmatpush.bf16.msra.mxu0 %v632
    %921 = vmatpush.bf16.msra.mxu0 %v630
    %922 = vmatpush.bf16.msra.mxu0 %v628
    %923 = vmatmul.bf16.gmra.mxu0 %v144
    %v924 = vpop.f32.mrf.mxu0
    %v925 = vadd.f32 %v876, %v924
    %v926 = vpop.f32.mrf.mxu0
    %v927 = vadd.f32 %v878, %v926
    %928 = vmatmul.bf16.gmra.mxu0 %v151
    %v929 = vpop.f32.mrf.mxu0
    %v930 = vadd.f32 %v881, %v929
    %v931 = vpop.f32.mrf.mxu0
    %v932 = vadd.f32 %v883, %v931
    %933 = vmatmul.bf16.gmra.mxu0 %v158
    %v934 = vpop.f32.mrf.mxu0
    %v935 = vadd.f32 %v886, %v934
    %v936 = vpop.f32.mrf.mxu0
    %v937 = vadd.f32 %v888, %v936
    %938 = vmatmul.bf16.gmra.mxu0 %v165
    %v939 = vpop.f32.mrf.mxu0
    %v940 = vadd.f32 %v891, %v939
    %v941 = vpop.f32.mrf.mxu0
    %v942 = vadd.f32 %v893, %v941
    %943 = vmatmul.bf16.gmra.mxu0 %v172
    %v944 = vpop.f32.mrf.mxu0
    %v945 = vadd.f32 %v896, %v944
    %v946 = vpop.f32.mrf.mxu0
    %v947 = vadd.f32 %v898, %v946
    %948 = vmatmul.bf16.gmra.mxu0 %v179
    %v949 = vpop.f32.mrf.mxu0
    %v950 = vadd.f32 %v901, %v949
    %v951 = vpop.f32.mrf.mxu0
    %v952 = vadd.f32 %v903, %v951
    %953 = vmatmul.bf16.gmra.mxu0 %v186
    %v954 = vpop.f32.mrf.mxu0
    %v955 = vadd.f32 %v906, %v954
    %v956 = vpop.f32.mrf.mxu0
    %v957 = vadd.f32 %v908, %v956
    %958 = vmatmul.bf16.gmra.mxu0 %v193
    %v959 = vpop.f32.mrf.mxu0
    %v960 = vadd.f32 %v911, %v959
    %v961 = vpop.f32.mrf.mxu0
    %v962 = vadd.f32 %v913, %v961
    %963 = vdwg.mxu0
    %964 = vmatpush.bf16.msra.mxu0 %v658
    %965 = vmatpush.bf16.msra.mxu0 %v656
    %966 = vmatpush.bf16.msra.mxu0 %v654
    %967 = vmatpush.bf16.msra.mxu0 %v652
    %968 = vmatpush.bf16.msra.mxu0 %v650
    %969 = vmatpush.bf16.msra.mxu0 %v648
    %970 = vmatpush.bf16.msra.mxu0 %v646
    %971 = vmatpush.bf16.msra.mxu0 %v644
    %972 = vmatmul.bf16.gmra.mxu0 %v145
    %v973 = vpop.f32.mrf.mxu0
    %v974 = vadd.f32 %v925, %v973
    %v975 = vpop.f32.mrf.mxu0
    %v976 = vadd.f32 %v927, %v975
    %977 = vmatmul.bf16.gmra.mxu0 %v152
    %v978 = vpop.f32.mrf.mxu0
    %v979 = vadd.f32 %v930, %v978
    %v980 = vpop.f32.mrf.mxu0
    %v981 = vadd.f32 %v932, %v980
    %982 = vmatmul.bf16.gmra.mxu0 %v159
    %v983 = vpop.f32.mrf.mxu0
    %v984 = vadd.f32 %v935, %v983
    %v985 = vpop.f32.mrf.mxu0
    %v986 = vadd.f32 %v937, %v985
    %987 = vmatmul.bf16.gmra.mxu0 %v166
    %v988 = vpop.f32.mrf.mxu0
    %v989 = vadd.f32 %v940, %v988
    %v990 = vpop.f32.mrf.mxu0
    %v991 = vadd.f32 %v942, %v990
    %992 = vmatmul.bf16.gmra.mxu0 %v173
    %v993 = vpop.f32.mrf.mxu0
    %v994 = vadd.f32 %v945, %v993
    %v995 = vpop.f32.mrf.mxu0
    %v996 = vadd.f32 %v947, %v995
    %997 = vmatmul.bf16.gmra.mxu0 %v180
    %v998 = vpop.f32.mrf.mxu0
    %v999 = vadd.f32 %v950, %v998
    %v1000 = vpop.f32.mrf.mxu0
    %v1001 = vadd.f32 %v952, %v1000
    %1002 = vmatmul.bf16.gmra.mxu0 %v187
    %v1003 = vpop.f32.mrf.mxu0
    %v1004 = vadd.f32 %v955, %v1003
    %v1005 = vpop.f32.mrf.mxu0
    %v1006 = vadd.f32 %v957, %v1005
    %1007 = vmatmul.bf16.gmra.mxu0 %v194
    %v1008 = vpop.f32.mrf.mxu0
    %v1009 = vadd.f32 %v960, %v1008
    %v1010 = vpop.f32.mrf.mxu0
    %v1011 = vadd.f32 %v962, %v1010
    %1012 = vdwg.mxu0
    %1013 = vmatpush.bf16.msra.mxu0 %v674
    %1014 = vmatpush.bf16.msra.mxu0 %v672
    %1015 = vmatpush.bf16.msra.mxu0 %v670
    %1016 = vmatpush.bf16.msra.mxu0 %v668
    %1017 = vmatpush.bf16.msra.mxu0 %v666
    %1018 = vmatpush.bf16.msra.mxu0 %v664
    %1019 = vmatpush.bf16.msra.mxu0 %v662
    %1020 = vmatpush.bf16.msra.mxu0 %v660
    %1021 = vmatmul.bf16.gmra.mxu0 %v146
    %v1022 = vpop.f32.mrf.mxu0
    %v1023 = vadd.f32 %v974, %v1022
    %v1024 = vpop.f32.mrf.mxu0
    %v1025 = vadd.f32 %v976, %v1024
    %1026 = vmatmul.bf16.gmra.mxu0 %v153
    %v1027 = vpop.f32.mrf.mxu0
    %v1028 = vadd.f32 %v979, %v1027
    %v1029 = vpop.f32.mrf.mxu0
    %v1030 = vadd.f32 %v981, %v1029
    %1031 = vmatmul.bf16.gmra.mxu0 %v160
    %v1032 = vpop.f32.mrf.mxu0
    %v1033 = vadd.f32 %v984, %v1032
    %v1034 = vpop.f32.mrf.mxu0
    %v1035 = vadd.f32 %v986, %v1034
    %1036 = vmatmul.bf16.gmra.mxu0 %v167
    %v1037 = vpop.f32.mrf.mxu0
    %v1038 = vadd.f32 %v989, %v1037
    %v1039 = vpop.f32.mrf.mxu0
    %v1040 = vadd.f32 %v991, %v1039
    %1041 = vmatmul.bf16.gmra.mxu0 %v174
    %v1042 = vpop.f32.mrf.mxu0
    %v1043 = vadd.f32 %v994, %v1042
    %v1044 = vpop.f32.mrf.mxu0
    %v1045 = vadd.f32 %v996, %v1044
    %1046 = vmatmul.bf16.gmra.mxu0 %v181
    %v1047 = vpop.f32.mrf.mxu0
    %v1048 = vadd.f32 %v999, %v1047
    %v1049 = vpop.f32.mrf.mxu0
    %v1050 = vadd.f32 %v1001, %v1049
    %1051 = vmatmul.bf16.gmra.mxu0 %v188
    %v1052 = vpop.f32.mrf.mxu0
    %v1053 = vadd.f32 %v1004, %v1052
    %v1054 = vpop.f32.mrf.mxu0
    %v1055 = vadd.f32 %v1006, %v1054
    %1056 = vmatmul.bf16.gmra.mxu0 %v195
    %v1057 = vpop.f32.mrf.mxu0
    %v1058 = vadd.f32 %v1009, %v1057
    %v1059 = vpop.f32.mrf.mxu0
    %v1060 = vadd.f32 %v1011, %v1059
    %1061 = vdwg.mxu0
    %1062 = vmatpush.bf16.msra.mxu0 %v690
    %1063 = vmatpush.bf16.msra.mxu0 %v688
    %1064 = vmatpush.bf16.msra.mxu0 %v686
    %1065 = vmatpush.bf16.msra.mxu0 %v684
    %1066 = vmatpush.bf16.msra.mxu0 %v682
    %1067 = vmatpush.bf16.msra.mxu0 %v680
    %1068 = vmatpush.bf16.msra.mxu0 %v678
    %1069 = vmatpush.bf16.msra.mxu0 %v676
    %1070 = vmatmul.bf16.gmra.mxu0 %v147
    %v1071 = vpop.f32.mrf.mxu0
    %v1072 = vadd.f32 %v1023, %v1071
    %v1073 = vpop.f32.mrf.mxu0
    %v1074 = vadd.f32 %v1025, %v1073
    %1075 = vmatmul.bf16.gmra.mxu0 %v154
    %v1076 = vpop.f32.mrf.mxu0
    %v1077 = vadd.f32 %v1028, %v1076
    %v1078 = vpop.f32.mrf.mxu0
    %v1079 = vadd.f32 %v1030, %v1078
    %1080 = vmatmul.bf16.gmra.mxu0 %v161
    %v1081 = vpop.f32.mrf.mxu0
    %v1082 = vadd.f32 %v1033, %v1081
    %v1083 = vpop.f32.mrf.mxu0
    %v1084 = vadd.f32 %v1035, %v1083
    %1085 = vmatmul.bf16.gmra.mxu0 %v168
    %v1086 = vpop.f32.mrf.mxu0
    %v1087 = vadd.f32 %v1038, %v1086
    %v1088 = vpop.f32.mrf.mxu0
    %v1089 = vadd.f32 %v1040, %v1088
    %1090 = vmatmul.bf16.gmra.mxu0 %v175
    %v1091 = vpop.f32.mrf.mxu0
    %v1092 = vadd.f32 %v1043, %v1091
    %v1093 = vpop.f32.mrf.mxu0
    %v1094 = vadd.f32 %v1045, %v1093
    %1095 = vmatmul.bf16.gmra.mxu0 %v182
    %v1096 = vpop.f32.mrf.mxu0
    %v1097 = vadd.f32 %v1048, %v1096
    %v1098 = vpop.f32.mrf.mxu0
    %v1099 = vadd.f32 %v1050, %v1098
    %1100 = vmatmul.bf16.gmra.mxu0 %v189
    %v1101 = vpop.f32.mrf.mxu0
    %v1102 = vadd.f32 %v1053, %v1101
    %v1103 = vpop.f32.mrf.mxu0
    %v1104 = vadd.f32 %v1055, %v1103
    %1105 = vmatmul.bf16.gmra.mxu0 %v196
    %v1106 = vpop.f32.mrf.mxu0
    %v1107 = vadd.f32 %v1058, %v1106
    %v1108 = vpop.f32.mrf.mxu0
    %v1109 = vadd.f32 %v1060, %v1108
    %1110 = vdwg.mxu0
    %1111 = vmatpush.bf16.msra.mxu0 0
    %1112 = vmatpush.bf16.msra.mxu0 0
    %1113 = vmatpush.bf16.msra.mxu0 0
    %1114 = vmatpush.bf16.msra.mxu0 0
    %1115 = vmatpush.bf16.msra.mxu0 0
    %1116 = vmatpush.bf16.msra.mxu0 0
    %1117 = vmatpush.bf16.msra.mxu0 0
    %1118 = vmatpush.bf16.msra.mxu0 %v692
    %1119 = vmatmul.bf16.gmra.mxu0 %v794
    %v1120 = vpop.f32.mrf.mxu0
    %v1121 = vadd.f32 %v1072, %v1120
    %v1122 = vpop.f32.mrf.mxu0
    %v1123 = vadd.f32 %v1074, %v1122
    %1124 = vmatmul.bf16.gmra.mxu0 %v797
    %v1125 = vpop.f32.mrf.mxu0
    %v1126 = vadd.f32 %v1077, %v1125
    %v1127 = vpop.f32.mrf.mxu0
    %v1128 = vadd.f32 %v1079, %v1127
    %1129 = vmatmul.bf16.gmra.mxu0 %v800
    %v1130 = vpop.f32.mrf.mxu0
    %v1131 = vadd.f32 %v1082, %v1130
    %v1132 = vpop.f32.mrf.mxu0
    %v1133 = vadd.f32 %v1084, %v1132
    %1134 = vmatmul.bf16.gmra.mxu0 %v803
    %v1135 = vpop.f32.mrf.mxu0
    %v1136 = vadd.f32 %v1087, %v1135
    %v1137 = vpop.f32.mrf.mxu0
    %v1138 = vadd.f32 %v1089, %v1137
    %1139 = vmatmul.bf16.gmra.mxu0 %v806
    %v1140 = vpop.f32.mrf.mxu0
    %v1141 = vadd.f32 %v1092, %v1140
    %v1142 = vpop.f32.mrf.mxu0
    %v1143 = vadd.f32 %v1094, %v1142
    %1144 = vmatmul.bf16.gmra.mxu0 %v809
    %v1145 = vpop.f32.mrf.mxu0
    %v1146 = vadd.f32 %v1097, %v1145
    %v1147 = vpop.f32.mrf.mxu0
    %v1148 = vadd.f32 %v1099, %v1147
    %1149 = vmatmul.bf16.gmra.mxu0 %v812
    %v1150 = vpop.f32.mrf.mxu0
    %v1151 = vadd.f32 %v1102, %v1150
    %v1152 = vpop.f32.mrf.mxu0
    %v1153 = vadd.f32 %v1104, %v1152
    %1154 = vmatmul.bf16.gmra.mxu0 %v815
    %v1155 = vpop.f32.mrf.mxu0
    %v1156 = vadd.f32 %v1107, %v1155
    %v1157 = vpop.f32.mrf.mxu0
    %v1158 = vadd.f32 %v1109, %v1157
    %1159 = vdwg.mxu0
    %1160 = vmatpush.bf16.msra.mxu0 %v611
    %1161 = vmatpush.bf16.msra.mxu0 %v609
    %1162 = vmatpush.bf16.msra.mxu0 %v607
    %1163 = vmatpush.bf16.msra.mxu0 %v605
    %1164 = vmatpush.bf16.msra.mxu0 %v603
    %1165 = vmatpush.bf16.msra.mxu0 %v601
    %1166 = vmatpush.bf16.msra.mxu0 %v599
    %1167 = vmatpush.bf16.msra.mxu0 %v597
    %1168 = vmatmul.bf16.gmra.mxu0 %v142
    %v1169 = vpop.f32.mrf.mxu0
    %v1170 = vadd.f32 %v299, %v1169
    %v1171 = vpop.f32.mrf.mxu0
    %v1172 = vadd.f32 %v299, %v1171
    %1173 = vmatmul.bf16.gmra.mxu0 %v149
    %v1174 = vpop.f32.mrf.mxu0
    %v1175 = vadd.f32 %v299, %v1174
    %v1176 = vpop.f32.mrf.mxu0
    %v1177 = vadd.f32 %v299, %v1176
    %1178 = vmatmul.bf16.gmra.mxu0 %v156
    %v1179 = vpop.f32.mrf.mxu0
    %v1180 = vadd.f32 %v299, %v1179
    %v1181 = vpop.f32.mrf.mxu0
    %v1182 = vadd.f32 %v299, %v1181
    %1183 = vmatmul.bf16.gmra.mxu0 %v163
    %v1184 = vpop.f32.mrf.mxu0
    %v1185 = vadd.f32 %v299, %v1184
    %v1186 = vpop.f32.mrf.mxu0
    %v1187 = vadd.f32 %v299, %v1186
    %1188 = vmatmul.bf16.gmra.mxu0 %v170
    %v1189 = vpop.f32.mrf.mxu0
    %v1190 = vadd.f32 %v299, %v1189
    %v1191 = vpop.f32.mrf.mxu0
    %v1192 = vadd.f32 %v299, %v1191
    %1193 = vmatmul.bf16.gmra.mxu0 %v177
    %v1194 = vpop.f32.mrf.mxu0
    %v1195 = vadd.f32 %v299, %v1194
    %v1196 = vpop.f32.mrf.mxu0
    %v1197 = vadd.f32 %v299, %v1196
    %1198 = vmatmul.bf16.gmra.mxu0 %v184
    %v1199 = vpop.f32.mrf.mxu0
    %v1200 = vadd.f32 %v299, %v1199
    %v1201 = vpop.f32.mrf.mxu0
    %v1202 = vadd.f32 %v299, %v1201
    %1203 = vmatmul.bf16.gmra.mxu0 %v191
    %v1204 = vpop.f32.mrf.mxu0
    %v1205 = vadd.f32 %v299, %v1204
    %v1206 = vpop.f32.mrf.mxu0
    %v1207 = vadd.f32 %v299, %v1206
    %1208 = vdwg.mxu0
    %1209 = vmatpush.bf16.msra.mxu0 %v627
    %1210 = vmatpush.bf16.msra.mxu0 %v625
    %1211 = vmatpush.bf16.msra.mxu0 %v623
    %1212 = vmatpush.bf16.msra.mxu0 %v621
    %1213 = vmatpush.bf16.msra.mxu0 %v619
    %1214 = vmatpush.bf16.msra.mxu0 %v617
    %1215 = vmatpush.bf16.msra.mxu0 %v615
    %1216 = vmatpush.bf16.msra.mxu0 %v613
    %1217 = vmatmul.bf16.gmra.mxu0 %v143
    %v1218 = vpop.f32.mrf.mxu0
    %v1219 = vadd.f32 %v1170, %v1218
    %v1220 = vpop.f32.mrf.mxu0
    %v1221 = vadd.f32 %v1172, %v1220
    %1222 = vmatmul.bf16.gmra.mxu0 %v150
    %v1223 = vpop.f32.mrf.mxu0
    %v1224 = vadd.f32 %v1175, %v1223
    %v1225 = vpop.f32.mrf.mxu0
    %v1226 = vadd.f32 %v1177, %v1225
    %1227 = vmatmul.bf16.gmra.mxu0 %v157
    %v1228 = vpop.f32.mrf.mxu0
    %v1229 = vadd.f32 %v1180, %v1228
    %v1230 = vpop.f32.mrf.mxu0
    %v1231 = vadd.f32 %v1182, %v1230
    %1232 = vmatmul.bf16.gmra.mxu0 %v164
    %v1233 = vpop.f32.mrf.mxu0
    %v1234 = vadd.f32 %v1185, %v1233
    %v1235 = vpop.f32.mrf.mxu0
    %v1236 = vadd.f32 %v1187, %v1235
    %1237 = vmatmul.bf16.gmra.mxu0 %v171
    %v1238 = vpop.f32.mrf.mxu0
    %v1239 = vadd.f32 %v1190, %v1238
    %v1240 = vpop.f32.mrf.mxu0
    %v1241 = vadd.f32 %v1192, %v1240
    %1242 = vmatmul.bf16.gmra.mxu0 %v178
    %v1243 = vpop.f32.mrf.mxu0
    %v1244 = vadd.f32 %v1195, %v1243
    %v1245 = vpop.f32.mrf.mxu0
    %v1246 = vadd.f32 %v1197, %v1245
    %1247 = vmatmul.bf16.gmra.mxu0 %v185
    %v1248 = vpop.f32.mrf.mxu0
    %v1249 = vadd.f32 %v1200, %v1248
    %v1250 = vpop.f32.mrf.mxu0
    %v1251 = vadd.f32 %v1202, %v1250
    %1252 = vmatmul.bf16.gmra.mxu0 %v192
    %v1253 = vpop.f32.mrf.mxu0
    %v1254 = vadd.f32 %v1205, %v1253
    %v1255 = vpop.f32.mrf.mxu0
    %v1256 = vadd.f32 %v1207, %v1255
    %1257 = vdwg.mxu0
    %1258 = vmatpush.bf16.msra.mxu0 %v643
    %1259 = vmatpush.bf16.msra.mxu0 %v641
    %1260 = vmatpush.bf16.msra.mxu0 %v639
    %1261 = vmatpush.bf16.msra.mxu0 %v637
    %1262 = vmatpush.bf16.msra.mxu0 %v635
    %1263 = vmatpush.bf16.msra.mxu0 %v633
    %1264 = vmatpush.bf16.msra.mxu0 %v631
    %1265 = vmatpush.bf16.msra.mxu0 %v629
    %1266 = vmatmul.bf16.gmra.mxu0 %v144
    %v1267 = vpop.f32.mrf.mxu0
    %v1268 = vadd.f32 %v1219, %v1267
    %v1269 = vpop.f32.mrf.mxu0
    %v1270 = vadd.f32 %v1221, %v1269
    %1271 = vmatmul.bf16.gmra.mxu0 %v151
    %v1272 = vpop.f32.mrf.mxu0
    %v1273 = vadd.f32 %v1224, %v1272
    %v1274 = vpop.f32.mrf.mxu0
    %v1275 = vadd.f32 %v1226, %v1274
    %1276 = vmatmul.bf16.gmra.mxu0 %v158
    %v1277 = vpop.f32.mrf.mxu0
    %v1278 = vadd.f32 %v1229, %v1277
    %v1279 = vpop.f32.mrf.mxu0
    %v1280 = vadd.f32 %v1231, %v1279
    %1281 = vmatmul.bf16.gmra.mxu0 %v165
    %v1282 = vpop.f32.mrf.mxu0
    %v1283 = vadd.f32 %v1234, %v1282
    %v1284 = vpop.f32.mrf.mxu0
    %v1285 = vadd.f32 %v1236, %v1284
    %1286 = vmatmul.bf16.gmra.mxu0 %v172
    %v1287 = vpop.f32.mrf.mxu0
    %v1288 = vadd.f32 %v1239, %v1287
    %v1289 = vpop.f32.mrf.mxu0
    %v1290 = vadd.f32 %v1241, %v1289
    %1291 = vmatmul.bf16.gmra.mxu0 %v179
    %v1292 = vpop.f32.mrf.mxu0
    %v1293 = vadd.f32 %v1244, %v1292
    %v1294 = vpop.f32.mrf.mxu0
    %v1295 = vadd.f32 %v1246, %v1294
    %1296 = vmatmul.bf16.gmra.mxu0 %v186
    %v1297 = vpop.f32.mrf.mxu0
    %v1298 = vadd.f32 %v1249, %v1297
    %v1299 = vpop.f32.mrf.mxu0
    %v1300 = vadd.f32 %v1251, %v1299
    %1301 = vmatmul.bf16.gmra.mxu0 %v193
    %v1302 = vpop.f32.mrf.mxu0
    %v1303 = vadd.f32 %v1254, %v1302
    %v1304 = vpop.f32.mrf.mxu0
    %v1305 = vadd.f32 %v1256, %v1304
    %1306 = vdwg.mxu0
    %1307 = vmatpush.bf16.msra.mxu0 %v659
    %1308 = vmatpush.bf16.msra.mxu0 %v657
    %1309 = vmatpush.bf16.msra.mxu0 %v655
    %1310 = vmatpush.bf16.msra.mxu0 %v653
    %1311 = vmatpush.bf16.msra.mxu0 %v651
    %1312 = vmatpush.bf16.msra.mxu0 %v649
    %1313 = vmatpush.bf16.msra.mxu0 %v647
    %1314 = vmatpush.bf16.msra.mxu0 %v645
    %1315 = vmatmul.bf16.gmra.mxu0 %v145
    %v1316 = vpop.f32.mrf.mxu0
    %v1317 = vadd.f32 %v1268, %v1316
    %v1318 = vpop.f32.mrf.mxu0
    %v1319 = vadd.f32 %v1270, %v1318
    %1320 = vmatmul.bf16.gmra.mxu0 %v152
    %v1321 = vpop.f32.mrf.mxu0
    %v1322 = vadd.f32 %v1273, %v1321
    %v1323 = vpop.f32.mrf.mxu0
    %v1324 = vadd.f32 %v1275, %v1323
    %1325 = vmatmul.bf16.gmra.mxu0 %v159
    %v1326 = vpop.f32.mrf.mxu0
    %v1327 = vadd.f32 %v1278, %v1326
    %v1328 = vpop.f32.mrf.mxu0
    %v1329 = vadd.f32 %v1280, %v1328
    %1330 = vmatmul.bf16.gmra.mxu0 %v166
    %v1331 = vpop.f32.mrf.mxu0
    %v1332 = vadd.f32 %v1283, %v1331
    %v1333 = vpop.f32.mrf.mxu0
    %v1334 = vadd.f32 %v1285, %v1333
    %1335 = vmatmul.bf16.gmra.mxu0 %v173
    %v1336 = vpop.f32.mrf.mxu0
    %v1337 = vadd.f32 %v1288, %v1336
    %v1338 = vpop.f32.mrf.mxu0
    %v1339 = vadd.f32 %v1290, %v1338
    %1340 = vmatmul.bf16.gmra.mxu0 %v180
    %v1341 = vpop.f32.mrf.mxu0
    %v1342 = vadd.f32 %v1293, %v1341
    %v1343 = vpop.f32.mrf.mxu0
    %v1344 = vadd.f32 %v1295, %v1343
    %1345 = vmatmul.bf16.gmra.mxu0 %v187
    %v1346 = vpop.f32.mrf.mxu0
    %v1347 = vadd.f32 %v1298, %v1346
    %v1348 = vpop.f32.mrf.mxu0
    %v1349 = vadd.f32 %v1300, %v1348
    %1350 = vmatmul.bf16.gmra.mxu0 %v194
    %v1351 = vpop.f32.mrf.mxu0
    %v1352 = vadd.f32 %v1303, %v1351
    %v1353 = vpop.f32.mrf.mxu0
    %v1354 = vadd.f32 %v1305, %v1353
    %1355 = vdwg.mxu0
    %1356 = vmatpush.bf16.msra.mxu0 %v675
    %1357 = vmatpush.bf16.msra.mxu0 %v673
    %1358 = vmatpush.bf16.msra.mxu0 %v671
    %1359 = vmatpush.bf16.msra.mxu0 %v669
    %1360 = vmatpush.bf16.msra.mxu0 %v667
    %1361 = vmatpush.bf16.msra.mxu0 %v665
    %1362 = vmatpush.bf16.msra.mxu0 %v663
    %1363 = vmatpush.bf16.msra.mxu0 %v661
    %1364 = vmatmul.bf16.gmra.mxu0 %v146
    %v1365 = vpop.f32.mrf.mxu0
    %v1366 = vadd.f32 %v1317, %v1365
    %v1367 = vpop.f32.mrf.mxu0
    %v1368 = vadd.f32 %v1319, %v1367
    %1369 = vmatmul.bf16.gmra.mxu0 %v153
    %v1370 = vpop.f32.mrf.mxu0
    %v1371 = vadd.f32 %v1322, %v1370
    %v1372 = vpop.f32.mrf.mxu0
    %v1373 = vadd.f32 %v1324, %v1372
    %1374 = vmatmul.bf16.gmra.mxu0 %v160
    %v1375 = vpop.f32.mrf.mxu0
    %v1376 = vadd.f32 %v1327, %v1375
    %v1377 = vpop.f32.mrf.mxu0
    %v1378 = vadd.f32 %v1329, %v1377
    %1379 = vmatmul.bf16.gmra.mxu0 %v167
    %v1380 = vpop.f32.mrf.mxu0
    %v1381 = vadd.f32 %v1332, %v1380
    %v1382 = vpop.f32.mrf.mxu0
    %v1383 = vadd.f32 %v1334, %v1382
    %1384 = vmatmul.bf16.gmra.mxu0 %v174
    %v1385 = vpop.f32.mrf.mxu0
    %v1386 = vadd.f32 %v1337, %v1385
    %v1387 = vpop.f32.mrf.mxu0
    %v1388 = vadd.f32 %v1339, %v1387
    %1389 = vmatmul.bf16.gmra.mxu0 %v181
    %v1390 = vpop.f32.mrf.mxu0
    %v1391 = vadd.f32 %v1342, %v1390
    %v1392 = vpop.f32.mrf.mxu0
    %v1393 = vadd.f32 %v1344, %v1392
    %1394 = vmatmul.bf16.gmra.mxu0 %v188
    %v1395 = vpop.f32.mrf.mxu0
    %v1396 = vadd.f32 %v1347, %v1395
    %v1397 = vpop.f32.mrf.mxu0
    %v1398 = vadd.f32 %v1349, %v1397
    %1399 = vmatmul.bf16.gmra.mxu0 %v195
    %v1400 = vpop.f32.mrf.mxu0
    %v1401 = vadd.f32 %v1352, %v1400
    %v1402 = vpop.f32.mrf.mxu0
    %v1403 = vadd.f32 %v1354, %v1402
    %1404 = vdwg.mxu0
    %1405 = vmatpush.bf16.msra.mxu0 %v691
    %1406 = vmatpush.bf16.msra.mxu0 %v689
    %1407 = vmatpush.bf16.msra.mxu0 %v687
    %1408 = vmatpush.bf16.msra.mxu0 %v685
    %1409 = vmatpush.bf16.msra.mxu0 %v683
    %1410 = vmatpush.bf16.msra.mxu0 %v681
    %1411 = vmatpush.bf16.msra.mxu0 %v679
    %1412 = vmatpush.bf16.msra.mxu0 %v677
    %1413 = vmatmul.bf16.gmra.mxu0 %v147
    %v1414 = vpop.f32.mrf.mxu0
    %v1415 = vadd.f32 %v1366, %v1414
    %v1416 = vpop.f32.mrf.mxu0
    %v1417 = vadd.f32 %v1368, %v1416
    %1418 = vmatmul.bf16.gmra.mxu0 %v154
    %v1419 = vpop.f32.mrf.mxu0
    %v1420 = vadd.f32 %v1371, %v1419
    %v1421 = vpop.f32.mrf.mxu0
    %v1422 = vadd.f32 %v1373, %v1421
    %1423 = vmatmul.bf16.gmra.mxu0 %v161
    %v1424 = vpop.f32.mrf.mxu0
    %v1425 = vadd.f32 %v1376, %v1424
    %v1426 = vpop.f32.mrf.mxu0
    %v1427 = vadd.f32 %v1378, %v1426
    %1428 = vmatmul.bf16.gmra.mxu0 %v168
    %v1429 = vpop.f32.mrf.mxu0
    %v1430 = vadd.f32 %v1381, %v1429
    %v1431 = vpop.f32.mrf.mxu0
    %v1432 = vadd.f32 %v1383, %v1431
    %1433 = vmatmul.bf16.gmra.mxu0 %v175
    %v1434 = vpop.f32.mrf.mxu0
    %v1435 = vadd.f32 %v1386, %v1434
    %v1436 = vpop.f32.mrf.mxu0
    %v1437 = vadd.f32 %v1388, %v1436
    %1438 = vmatmul.bf16.gmra.mxu0 %v182
    %v1439 = vpop.f32.mrf.mxu0
    %v1440 = vadd.f32 %v1391, %v1439
    %v1441 = vpop.f32.mrf.mxu0
    %v1442 = vadd.f32 %v1393, %v1441
    %1443 = vmatmul.bf16.gmra.mxu0 %v189
    %v1444 = vpop.f32.mrf.mxu0
    %v1445 = vadd.f32 %v1396, %v1444
    %v1446 = vpop.f32.mrf.mxu0
    %v1447 = vadd.f32 %v1398, %v1446
    %1448 = vmatmul.bf16.gmra.mxu0 %v196
    %v1449 = vpop.f32.mrf.mxu0
    %v1450 = vadd.f32 %v1401, %v1449
    %v1451 = vpop.f32.mrf.mxu0
    %v1452 = vadd.f32 %v1403, %v1451
    %1453 = vdwg.mxu0
    %1454 = vmatpush.bf16.msra.mxu0 0
    %1455 = vmatpush.bf16.msra.mxu0 0
    %1456 = vmatpush.bf16.msra.mxu0 0
    %1457 = vmatpush.bf16.msra.mxu0 0
    %1458 = vmatpush.bf16.msra.mxu0 0
    %1459 = vmatpush.bf16.msra.mxu0 0
    %1460 = vmatpush.bf16.msra.mxu0 0
    %1461 = vmatpush.bf16.msra.mxu0 %v693
    %1462 = vmatmul.bf16.gmra.mxu0 %v794
    %v1463 = vpop.f32.mrf.mxu0
    %v1464 = vadd.f32 %v1415, %v1463
    %v1465 = vpop.f32.mrf.mxu0
    %v1466 = vadd.f32 %v1417, %v1465
    %1467 = vmatmul.bf16.gmra.mxu0 %v797
    %v1468 = vpop.f32.mrf.mxu0
    %v1469 = vadd.f32 %v1420, %v1468
    %v1470 = vpop.f32.mrf.mxu0
    %v1471 = vadd.f32 %v1422, %v1470
    %1472 = vmatmul.bf16.gmra.mxu0 %v800
    %v1473 = vpop.f32.mrf.mxu0
    %v1474 = vadd.f32 %v1425, %v1473
    %v1475 = vpop.f32.mrf.mxu0
    %v1476 = vadd.f32 %v1427, %v1475
    %1477 = vmatmul.bf16.gmra.mxu0 %v803
    %v1478 = vpop.f32.mrf.mxu0
    %v1479 = vadd.f32 %v1430, %v1478
    %v1480 = vpop.f32.mrf.mxu0
    %v1481 = vadd.f32 %v1432, %v1480
    %1482 = vmatmul.bf16.gmra.mxu0 %v806
    %v1483 = vpop.f32.mrf.mxu0
    %v1484 = vadd.f32 %v1435, %v1483
    %v1485 = vpop.f32.mrf.mxu0
    %v1486 = vadd.f32 %v1437, %v1485
    %1487 = vmatmul.bf16.gmra.mxu0 %v809
    %v1488 = vpop.f32.mrf.mxu0
    %v1489 = vadd.f32 %v1440, %v1488
    %v1490 = vpop.f32.mrf.mxu0
    %v1491 = vadd.f32 %v1442, %v1490
    %1492 = vmatmul.bf16.gmra.mxu0 %v812
    %v1493 = vpop.f32.mrf.mxu0
    %v1494 = vadd.f32 %v1445, %v1493
    %v1495 = vpop.f32.mrf.mxu0
    %v1496 = vadd.f32 %v1447, %v1495
    %1497 = vmatmul.bf16.gmra.mxu0 %v815
    %v1498 = vpop.f32.mrf.mxu0
    %v1499 = vadd.f32 %v1450, %v1498
    %v1500 = vpop.f32.mrf.mxu0
    %v1501 = vadd.f32 %v1452, %v1500
    %1502 = vdwg.mxu0
    %vm1503 = vcmp.gt.f32.partialorder %v1121, 0.0
    %vm1504 = vcmp.gt.f32.partialorder %v1464, 0.0
    %vm1505 = vcmp.gt.f32.partialorder %v1123, 0.0
    %vm1506 = vcmp.gt.f32.partialorder %v1466, 0.0
    %vm1507 = vcmp.gt.f32.partialorder %v1126, 0.0
    %vm1508 = vcmp.gt.f32.partialorder %v1469, 0.0
    %vm1509 = vcmp.gt.f32.partialorder %v1128, 0.0
    %vm1510 = vcmp.gt.f32.partialorder %v1471, 0.0
    %vm1511 = vcmp.gt.f32.partialorder %v1131, 0.0
    %vm1512 = vcmp.gt.f32.partialorder %v1474, 0.0
    %vm1513 = vcmp.gt.f32.partialorder %v1133, 0.0
    %vm1514 = vcmp.gt.f32.partialorder %v1476, 0.0
    %vm1515 = vcmp.gt.f32.partialorder %v1136, 0.0
    %vm1516 = vcmp.gt.f32.partialorder %v1479, 0.0
    %vm1517 = vcmp.gt.f32.partialorder %v1138, 0.0
    %vm1518 = vcmp.gt.f32.partialorder %v1481, 0.0
    %vm1519 = vcmp.gt.f32.partialorder %v1141, 0.0
    %vm1520 = vcmp.gt.f32.partialorder %v1484, 0.0
    %vm1521 = vcmp.gt.f32.partialorder %v1143, 0.0
    %vm1522 = vcmp.gt.f32.partialorder %v1486, 0.0
    %vm1523 = vcmp.gt.f32.partialorder %v1146, 0.0
    %vm1524 = vcmp.gt.f32.partialorder %v1489, 0.0
    %vm1525 = vcmp.gt.f32.partialorder %v1148, 0.0
    %vm1526 = vcmp.gt.f32.partialorder %v1491, 0.0
    %vm1527 = vcmp.gt.f32.partialorder %v1151, 0.0
    %vm1528 = vcmp.gt.f32.partialorder %v1494, 0.0
    %vm1529 = vcmp.gt.f32.partialorder %v1153, 0.0
    %vm1530 = vcmp.gt.f32.partialorder %v1496, 0.0
    %vm1531 = vcmp.gt.f32.partialorder %v1156, 0.0
    %vm1532 = vcmp.gt.f32.partialorder %v1499, 0.0
    %vm1533 = vcmp.gt.f32.partialorder %v1158, 0.0
    %vm1534 = vcmp.gt.f32.partialorder %v1501, 0.0
    %v1535 = vmul.f32 %v1121, 0.2
    %v1536 = vmul.f32 %v1464, 0.2
    %v1537 = vmul.f32 %v1123, 0.2
    %v1538 = vmul.f32 %v1466, 0.2
    %v1539 = vmul.f32 %v1126, 0.2
    %v1540 = vmul.f32 %v1469, 0.2
    %v1541 = vmul.f32 %v1128, 0.2
    %v1542 = vmul.f32 %v1471, 0.2
    %v1543 = vmul.f32 %v1131, 0.2
    %v1544 = vmul.f32 %v1474, 0.2
    %v1545 = vmul.f32 %v1133, 0.2
    %v1546 = vmul.f32 %v1476, 0.2
    %v1547 = vmul.f32 %v1136, 0.2
    %v1548 = vmul.f32 %v1479, 0.2
    %v1549 = vmul.f32 %v1138, 0.2
    %v1550 = vmul.f32 %v1481, 0.2
    %v1551 = vmul.f32 %v1141, 0.2
    %v1552 = vmul.f32 %v1484, 0.2
    %v1553 = vmul.f32 %v1143, 0.2
    %v1554 = vmul.f32 %v1486, 0.2
    %v1555 = vmul.f32 %v1146, 0.2
    %v1556 = vmul.f32 %v1489, 0.2
    %v1557 = vmul.f32 %v1148, 0.2
    %v1558 = vmul.f32 %v1491, 0.2
    %v1559 = vmul.f32 %v1151, 0.2
    %v1560 = vmul.f32 %v1494, 0.2
    %v1561 = vmul.f32 %v1153, 0.2
    %v1562 = vmul.f32 %v1496, 0.2
    %v1563 = vmul.f32 %v1156, 0.2
    %v1564 = vmul.f32 %v1499, 0.2
    %v1565 = vmul.f32 %v1158, 0.2
    %v1566 = vmul.f32 %v1501, 0.2
    %v1567 = vsel %vm1503, %v1121, %v1535
    %v1568 = vsel %vm1504, %v1464, %v1536
    %v1569 = vsel %vm1505, %v1123, %v1537
    %v1570 = vsel %vm1506, %v1466, %v1538
    %v1571 = vsel %vm1507, %v1126, %v1539
    %v1572 = vsel %vm1508, %v1469, %v1540
    %v1573 = vsel %vm1509, %v1128, %v1541
    %v1574 = vsel %vm1510, %v1471, %v1542
    %v1575 = vsel %vm1511, %v1131, %v1543
    %v1576 = vsel %vm1512, %v1474, %v1544
    %v1577 = vsel %vm1513, %v1133, %v1545
    %v1578 = vsel %vm1514, %v1476, %v1546
    %v1579 = vsel %vm1515, %v1136, %v1547
    %v1580 = vsel %vm1516, %v1479, %v1548
    %v1581 = vsel %vm1517, %v1138, %v1549
    %v1582 = vsel %vm1518, %v1481, %v1550
    %v1583 = vsel %vm1519, %v1141, %v1551
    %v1584 = vsel %vm1520, %v1484, %v1552
    %v1585 = vsel %vm1521, %v1143, %v1553
    %v1586 = vsel %vm1522, %v1486, %v1554
    %v1587 = vsel %vm1523, %v1146, %v1555
    %v1588 = vsel %vm1524, %v1489, %v1556
    %v1589 = vsel %vm1525, %v1148, %v1557
    %v1590 = vsel %vm1526, %v1491, %v1558
    %v1591 = vsel %vm1527, %v1151, %v1559
    %v1592 = vsel %vm1528, %v1494, %v1560
    %v1593 = vsel %vm1529, %v1153, %v1561
    %v1594 = vsel %vm1530, %v1496, %v1562
    %v1595 = vsel %vm1531, %v1156, %v1563
    %v1596 = vsel %vm1532, %v1499, %v1564
    %v1597 = vsel %vm1533, %v1158, %v1565
    %v1598 = vsel %vm1534, %v1501, %v1566
    %v1599 = vpack.c.bf16 %v1569, %v1567
    %v1600 = vpack.c.bf16 %v1570, %v1568
    %v1601 = vpack.c.bf16 %v1573, %v1571
    %v1602 = vpack.c.bf16 %v1574, %v1572
    %v1603 = vpack.c.bf16 %v1577, %v1575
    %v1604 = vpack.c.bf16 %v1578, %v1576
    %v1605 = vpack.c.bf16 %v1581, %v1579
    %v1606 = vpack.c.bf16 %v1582, %v1580
    %v1607 = vpack.c.bf16 %v1585, %v1583
    %v1608 = vpack.c.bf16 %v1586, %v1584
    %v1609 = vpack.c.bf16 %v1589, %v1587
    %v1610 = vpack.c.bf16 %v1590, %v1588
    %v1611 = vpack.c.bf16 %v1593, %v1591
    %v1612 = vpack.c.bf16 %v1594, %v1592
    %v1613 = vpack.c.bf16 %v1597, %v1595
    %v1614 = vpack.c.bf16 %v1598, %v1596
    %v1615 = vld [vmem:[%s3] sm:$0xff]
    %v1616 = vld [vmem:[%s3 + $0x8] sm:$0xff]
    %v1617 = vld [vmem:[%s3 + $0x10] sm:$0xff]
    %v1618 = vld [vmem:[%s3 + $0x18] sm:$0xff]
    %v1619 = vld [vmem:[%s3 + $0x20] sm:$0xff]
    %v1620 = vld [vmem:[%s3 + $0x28] sm:$0xff]
    %v1621 = vld [vmem:[%s3 + $0x30] sm:$0xff]
    %v1622 = vld [vmem:[%s3 + $0x38] sm:$0xff]
    %v1623 = vld [vmem:[%s3 + $0x40] sm:$0xff]
    %v1624 = vld [vmem:[%s3 + $0x48] sm:$0xff]
    %v1625 = vld [vmem:[%s3 + $0x50] sm:$0xff]
    %v1626 = vld [vmem:[%s3 + $0x58] sm:$0xff]
    %v1627 = vld [vmem:[%s3 + $0x60] sm:$0xff]
    %v1628 = vld [vmem:[%s3 + $0x68] sm:$0xff]
    %v1629 = vld [vmem:[%s3 + $0x70] sm:$0xff]
    %v1630 = vld [vmem:[%s3 + $0x78] sm:$0xff]
    %v1631 = vld [vmem:[%s3 + $0x80] sm:$0xff]
    %v1632 = vld [vmem:[%s3 + $0x88] sm:$0xff]
    %v1633 = vld [vmem:[%s3 + $0x90] sm:$0xff]
    %v1634 = vld [vmem:[%s3 + $0x98] sm:$0xff]
    %v1635 = vld [vmem:[%s3 + $0xa0] sm:$0xff]
    %v1636 = vld [vmem:[%s3 + $0xa8] sm:$0xff]
    %v1637 = vld [vmem:[%s3 + $0xb0] sm:$0xff]
    %v1638 = vld [vmem:[%s3 + $0xb8] sm:$0xff]
    %v1639 = vld [vmem:[%s3 + $0xc0] sm:$0xff]
    %v1640 = vld [vmem:[%s3 + $0xc8] sm:$0xff]
    %v1641 = vld [vmem:[%s3 + $0xd0] sm:$0xff]
    %v1642 = vld [vmem:[%s3 + $0xd8] sm:$0xff]
    %v1643 = vld [vmem:[%s3 + $0xe0] sm:$0xff]
    %v1644 = vld [vmem:[%s3 + $0xe8] sm:$0xff]
    %v1645 = vld [vmem:[%s3 + $0xf0] sm:$0xff]
    %v1646 = vld [vmem:[%s3 + $0xf8] sm:$0xff]
    %v1647 = vld [vmem:[%s4] sm:$0x3]
    %v1649 = vperm.slane %v1647, 0
    %v1650 = vperm.slane %v1647, 1
    %v1685 = vunpack.c.l.b16 %v1615
    %v1686 = vunpack.c.h.b16 %v1615
    %v1687 = vunpack.c.l.b16 %v1616
    %v1688 = vunpack.c.h.b16 %v1616
    %v1689 = vunpack.c.l.b16 %v1617
    %v1690 = vunpack.c.h.b16 %v1617
    %v1691 = vunpack.c.l.b16 %v1618
    %v1692 = vunpack.c.h.b16 %v1618
    %v1693 = vunpack.c.l.b16 %v1619
    %v1694 = vunpack.c.h.b16 %v1619
    %v1695 = vunpack.c.l.b16 %v1620
    %v1696 = vunpack.c.h.b16 %v1620
    %v1697 = vunpack.c.l.b16 %v1621
    %v1698 = vunpack.c.h.b16 %v1621
    %v1699 = vunpack.c.l.b16 %v1622
    %v1700 = vunpack.c.h.b16 %v1622
    %v1701 = vunpack.c.l.b16 %v1623
    %v1702 = vunpack.c.h.b16 %v1623
    %v1703 = vunpack.c.l.b16 %v1624
    %v1704 = vunpack.c.h.b16 %v1624
    %v1705 = vunpack.c.l.b16 %v1625
    %v1706 = vunpack.c.h.b16 %v1625
    %v1707 = vunpack.c.l.b16 %v1626
    %v1708 = vunpack.c.h.b16 %v1626
    %v1709 = vunpack.c.l.b16 %v1627
    %v1710 = vunpack.c.h.b16 %v1627
    %v1711 = vunpack.c.l.b16 %v1628
    %v1712 = vunpack.c.h.b16 %v1628
    %v1713 = vunpack.c.l.b16 %v1629
    %v1714 = vunpack.c.h.b16 %v1629
    %v1715 = vunpack.c.l.b16 %v1630
    %v1716 = vunpack.c.h.b16 %v1630
    %v1717 = vunpack.c.l.b16 %v1631
    %v1718 = vunpack.c.h.b16 %v1631
    %v1719 = vunpack.c.l.b16 %v1632
    %v1720 = vunpack.c.h.b16 %v1632
    %v1721 = vunpack.c.l.b16 %v1633
    %v1722 = vunpack.c.h.b16 %v1633
    %v1723 = vunpack.c.l.b16 %v1634
    %v1724 = vunpack.c.h.b16 %v1634
    %v1725 = vunpack.c.l.b16 %v1635
    %v1726 = vunpack.c.h.b16 %v1635
    %v1727 = vunpack.c.l.b16 %v1636
    %v1728 = vunpack.c.h.b16 %v1636
    %v1729 = vunpack.c.l.b16 %v1637
    %v1730 = vunpack.c.h.b16 %v1637
    %v1731 = vunpack.c.l.b16 %v1638
    %v1732 = vunpack.c.h.b16 %v1638
    %v1733 = vunpack.c.l.b16 %v1639
    %v1734 = vunpack.c.h.b16 %v1639
    %v1735 = vunpack.c.l.b16 %v1640
    %v1736 = vunpack.c.h.b16 %v1640
    %v1737 = vunpack.c.l.b16 %v1641
    %v1738 = vunpack.c.h.b16 %v1641
    %v1739 = vunpack.c.l.b16 %v1642
    %v1740 = vunpack.c.h.b16 %v1642
    %v1741 = vunpack.c.l.b16 %v1643
    %v1742 = vunpack.c.h.b16 %v1643
    %v1743 = vunpack.c.l.b16 %v1644
    %v1744 = vunpack.c.h.b16 %v1644
    %v1745 = vunpack.c.l.b16 %v1645
    %v1746 = vunpack.c.h.b16 %v1645
    %v1747 = vunpack.c.l.b16 %v1646
    %v1748 = vunpack.c.h.b16 %v1646
    %v1749 = vpack.c.b16 %v1687, %v1685
    %v1750 = vpack.c.b16 %v1688, %v1686
    %v1751 = vpack.c.b16 %v1691, %v1689
    %v1752 = vpack.c.b16 %v1692, %v1690
    %v1753 = vpack.c.b16 %v1695, %v1693
    %v1754 = vpack.c.b16 %v1696, %v1694
    %v1755 = vpack.c.b16 %v1699, %v1697
    %v1756 = vpack.c.b16 %v1700, %v1698
    %v1757 = vpack.c.b16 %v1703, %v1701
    %v1758 = vpack.c.b16 %v1704, %v1702
    %v1759 = vpack.c.b16 %v1707, %v1705
    %v1760 = vpack.c.b16 %v1708, %v1706
    %v1761 = vpack.c.b16 %v1711, %v1709
    %v1762 = vpack.c.b16 %v1712, %v1710
    %v1763 = vpack.c.b16 %v1715, %v1713
    %v1764 = vpack.c.b16 %v1716, %v1714
    %v1765 = vpack.c.b16 %v1719, %v1717
    %v1766 = vpack.c.b16 %v1720, %v1718
    %v1767 = vpack.c.b16 %v1723, %v1721
    %v1768 = vpack.c.b16 %v1724, %v1722
    %v1769 = vpack.c.b16 %v1727, %v1725
    %v1770 = vpack.c.b16 %v1728, %v1726
    %v1771 = vpack.c.b16 %v1731, %v1729
    %v1772 = vpack.c.b16 %v1732, %v1730
    %v1773 = vpack.c.b16 %v1735, %v1733
    %v1774 = vpack.c.b16 %v1736, %v1734
    %v1775 = vpack.c.b16 %v1739, %v1737
    %v1776 = vpack.c.b16 %v1740, %v1738
    %v1777 = vpack.c.b16 %v1743, %v1741
    %v1778 = vpack.c.b16 %v1744, %v1742
    %v1779 = vpack.c.b16 %v1747, %v1745
    %v1780 = vpack.c.b16 %v1748, %v1746
    %1813 = vmatpush.bf16.msra.mxu0 %v1763
    %1814 = vmatpush.bf16.msra.mxu0 %v1761
    %1815 = vmatpush.bf16.msra.mxu0 %v1759
    %1816 = vmatpush.bf16.msra.mxu0 %v1757
    %1817 = vmatpush.bf16.msra.mxu0 %v1755
    %1818 = vmatpush.bf16.msra.mxu0 %v1753
    %1819 = vmatpush.bf16.msra.mxu0 %v1751
    %1820 = vmatpush.bf16.msra.mxu0 %v1749
    %1821 = vmatmul.bf16.gmra.mxu0 %v1599
    %v1822 = vpop.f32.mrf.mxu0
    %v1823 = vadd.f32 %v1649, %v1822
    %v1824 = vpop.f32.mrf.mxu0
    %v1825 = vadd.f32 %v1649, %v1824
    %1826 = vmatmul.bf16.gmra.mxu0 %v1601
    %v1827 = vpop.f32.mrf.mxu0
    %v1828 = vadd.f32 %v1649, %v1827
    %v1829 = vpop.f32.mrf.mxu0
    %v1830 = vadd.f32 %v1649, %v1829
    %1831 = vmatmul.bf16.gmra.mxu0 %v1603
    %v1832 = vpop.f32.mrf.mxu0
    %v1833 = vadd.f32 %v1649, %v1832
    %v1834 = vpop.f32.mrf.mxu0
    %v1835 = vadd.f32 %v1649, %v1834
    %1836 = vmatmul.bf16.gmra.mxu0 %v1605
    %v1837 = vpop.f32.mrf.mxu0
    %v1838 = vadd.f32 %v1649, %v1837
    %v1839 = vpop.f32.mrf.mxu0
    %v1840 = vadd.f32 %v1649, %v1839
    %1841 = vmatmul.bf16.gmra.mxu0 %v1607
    %v1842 = vpop.f32.mrf.mxu0
    %v1843 = vadd.f32 %v1649, %v1842
    %v1844 = vpop.f32.mrf.mxu0
    %v1845 = vadd.f32 %v1649, %v1844
    %1846 = vmatmul.bf16.gmra.mxu0 %v1609
    %v1847 = vpop.f32.mrf.mxu0
    %v1848 = vadd.f32 %v1649, %v1847
    %v1849 = vpop.f32.mrf.mxu0
    %v1850 = vadd.f32 %v1649, %v1849
    %1851 = vmatmul.bf16.gmra.mxu0 %v1611
    %v1852 = vpop.f32.mrf.mxu0
    %v1853 = vadd.f32 %v1649, %v1852
    %v1854 = vpop.f32.mrf.mxu0
    %v1855 = vadd.f32 %v1649, %v1854
    %1856 = vmatmul.bf16.gmra.mxu0 %v1613
    %v1857 = vpop.f32.mrf.mxu0
    %v1858 = vadd.f32 %v1649, %v1857
    %v1859 = vpop.f32.mrf.mxu0
    %v1860 = vadd.f32 %v1649, %v1859
    %1861 = vdwg.mxu0
    %1862 = vmatpush.bf16.msra.mxu0 %v1779
    %1863 = vmatpush.bf16.msra.mxu0 %v1777
    %1864 = vmatpush.bf16.msra.mxu0 %v1775
    %1865 = vmatpush.bf16.msra.mxu0 %v1773
    %1866 = vmatpush.bf16.msra.mxu0 %v1771
    %1867 = vmatpush.bf16.msra.mxu0 %v1769
    %1868 = vmatpush.bf16.msra.mxu0 %v1767
    %1869 = vmatpush.bf16.msra.mxu0 %v1765
    %1870 = vmatmul.bf16.gmra.mxu0 %v1600
    %v1871 = vpop.f32.mrf.mxu0
    %v1872 = vadd.f32 %v1823, %v1871
    %v1873 = vpop.f32.mrf.mxu0
    %v1874 = vadd.f32 %v1825, %v1873
    %1875 = vmatmul.bf16.gmra.mxu0 %v1602
    %v1876 = vpop.f32.mrf.mxu0
    %v1877 = vadd.f32 %v1828, %v1876
    %v1878 = vpop.f32.mrf.mxu0
    %v1879 = vadd.f32 %v1830, %v1878
    %1880 = vmatmul.bf16.gmra.mxu0 %v1604
    %v1881 = vpop.f32.mrf.mxu0
    %v1882 = vadd.f32 %v1833, %v1881
    %v1883 = vpop.f32.mrf.mxu0
    %v1884 = vadd.f32 %v1835, %v1883
    %1885 = vmatmul.bf16.gmra.mxu0 %v1606
    %v1886 = vpop.f32.mrf.mxu0
    %v1887 = vadd.f32 %v1838, %v1886
    %v1888 = vpop.f32.mrf.mxu0
    %v1889 = vadd.f32 %v1840, %v1888
    %1890 = vmatmul.bf16.gmra.mxu0 %v1608
    %v1891 = vpop.f32.mrf.mxu0
    %v1892 = vadd.f32 %v1843, %v1891
    %v1893 = vpop.f32.mrf.mxu0
    %v1894 = vadd.f32 %v1845, %v1893
    %1895 = vmatmul.bf16.gmra.mxu0 %v1610
    %v1896 = vpop.f32.mrf.mxu0
    %v1897 = vadd.f32 %v1848, %v1896
    %v1898 = vpop.f32.mrf.mxu0
    %v1899 = vadd.f32 %v1850, %v1898
    %1900 = vmatmul.bf16.gmra.mxu0 %v1612
    %v1901 = vpop.f32.mrf.mxu0
    %v1902 = vadd.f32 %v1853, %v1901
    %v1903 = vpop.f32.mrf.mxu0
    %v1904 = vadd.f32 %v1855, %v1903
    %1905 = vmatmul.bf16.gmra.mxu0 %v1614
    %v1906 = vpop.f32.mrf.mxu0
    %v1907 = vadd.f32 %v1858, %v1906
    %v1908 = vpop.f32.mrf.mxu0
    %v1909 = vadd.f32 %v1860, %v1908
    %1910 = vdwg.mxu0
    %1911 = vmatpush.bf16.msra.mxu0 %v1764
    %1912 = vmatpush.bf16.msra.mxu0 %v1762
    %1913 = vmatpush.bf16.msra.mxu0 %v1760
    %1914 = vmatpush.bf16.msra.mxu0 %v1758
    %1915 = vmatpush.bf16.msra.mxu0 %v1756
    %1916 = vmatpush.bf16.msra.mxu0 %v1754
    %1917 = vmatpush.bf16.msra.mxu0 %v1752
    %1918 = vmatpush.bf16.msra.mxu0 %v1750
    %1919 = vmatmul.bf16.gmra.mxu0 %v1599
    %v1920 = vpop.f32.mrf.mxu0
    %v1921 = vadd.f32 %v1650, %v1920
    %v1922 = vpop.f32.mrf.mxu0
    %v1923 = vadd.f32 %v1650, %v1922
    %1924 = vmatmul.bf16.gmra.mxu0 %v1601
    %v1925 = vpop.f32.mrf.mxu0
    %v1926 = vadd.f32 %v1650, %v1925
    %v1927 = vpop.f32.mrf.mxu0
    %v1928 = vadd.f32 %v1650, %v1927
    %1929 = vmatmul.bf16.gmra.mxu0 %v1603
    %v1930 = vpop.f32.mrf.mxu0
    %v1931 = vadd.f32 %v1650, %v1930
    %v1932 = vpop.f32.mrf.mxu0
    %v1933 = vadd.f32 %v1650, %v1932
    %1934 = vmatmul.bf16.gmra.mxu0 %v1605
    %v1935 = vpop.f32.mrf.mxu0
    %v1936 = vadd.f32 %v1650, %v1935
    %v1937 = vpop.f32.mrf.mxu0
    %v1938 = vadd.f32 %v1650, %v1937
    %1939 = vmatmul.bf16.gmra.mxu0 %v1607
    %v1940 = vpop.f32.mrf.mxu0
    %v1941 = vadd.f32 %v1650, %v1940
    %v1942 = vpop.f32.mrf.mxu0
    %v1943 = vadd.f32 %v1650, %v1942
    %1944 = vmatmul.bf16.gmra.mxu0 %v1609
    %v1945 = vpop.f32.mrf.mxu0
    %v1946 = vadd.f32 %v1650, %v1945
    %v1947 = vpop.f32.mrf.mxu0
    %v1948 = vadd.f32 %v1650, %v1947
    %1949 = vmatmul.bf16.gmra.mxu0 %v1611
    %v1950 = vpop.f32.mrf.mxu0
    %v1951 = vadd.f32 %v1650, %v1950
    %v1952 = vpop.f32.mrf.mxu0
    %v1953 = vadd.f32 %v1650, %v1952
    %1954 = vmatmul.bf16.gmra.mxu0 %v1613
    %v1955 = vpop.f32.mrf.mxu0
    %v1956 = vadd.f32 %v1650, %v1955
    %v1957 = vpop.f32.mrf.mxu0
    %v1958 = vadd.f32 %v1650, %v1957
    %1959 = vdwg.mxu0
    %1960 = vmatpush.bf16.msra.mxu0 %v1780
    %1961 = vmatpush.bf16.msra.mxu0 %v1778
    %1962 = vmatpush.bf16.msra.mxu0 %v1776
    %1963 = vmatpush.bf16.msra.mxu0 %v1774
    %1964 = vmatpush.bf16.msra.mxu0 %v1772
    %1965 = vmatpush.bf16.msra.mxu0 %v1770
    %1966 = vmatpush.bf16.msra.mxu0 %v1768
    %1967 = vmatpush.bf16.msra.mxu0 %v1766
    %1968 = vmatmul.bf16.gmra.mxu0 %v1600
    %v1969 = vpop.f32.mrf.mxu0
    %v1970 = vadd.f32 %v1921, %v1969
    %v1971 = vpop.f32.mrf.mxu0
    %v1972 = vadd.f32 %v1923, %v1971
    %1973 = vmatmul.bf16.gmra.mxu0 %v1602
    %v1974 = vpop.f32.mrf.mxu0
    %v1975 = vadd.f32 %v1926, %v1974
    %v1976 = vpop.f32.mrf.mxu0
    %v1977 = vadd.f32 %v1928, %v1976
    %1978 = vmatmul.bf16.gmra.mxu0 %v1604
    %v1979 = vpop.f32.mrf.mxu0
    %v1980 = vadd.f32 %v1931, %v1979
    %v1981 = vpop.f32.mrf.mxu0
    %v1982 = vadd.f32 %v1933, %v1981
    %1983 = vmatmul.bf16.gmra.mxu0 %v1606
    %v1984 = vpop.f32.mrf.mxu0
    %v1985 = vadd.f32 %v1936, %v1984
    %v1986 = vpop.f32.mrf.mxu0
    %v1987 = vadd.f32 %v1938, %v1986
    %1988 = vmatmul.bf16.gmra.mxu0 %v1608
    %v1989 = vpop.f32.mrf.mxu0
    %v1990 = vadd.f32 %v1941, %v1989
    %v1991 = vpop.f32.mrf.mxu0
    %v1992 = vadd.f32 %v1943, %v1991
    %1993 = vmatmul.bf16.gmra.mxu0 %v1610
    %v1994 = vpop.f32.mrf.mxu0
    %v1995 = vadd.f32 %v1946, %v1994
    %v1996 = vpop.f32.mrf.mxu0
    %v1997 = vadd.f32 %v1948, %v1996
    %1998 = vmatmul.bf16.gmra.mxu0 %v1612
    %v1999 = vpop.f32.mrf.mxu0
    %v2000 = vadd.f32 %v1951, %v1999
    %v2001 = vpop.f32.mrf.mxu0
    %v2002 = vadd.f32 %v1953, %v2001
    %2003 = vmatmul.bf16.gmra.mxu0 %v1614
    %v2004 = vpop.f32.mrf.mxu0
    %v2005 = vadd.f32 %v1956, %v2004
    %v2006 = vpop.f32.mrf.mxu0
    %v2007 = vadd.f32 %v1958, %v2006
    %2008 = vdwg.mxu0
    %vm2009 = vcmp.gt.f32.partialorder %v1872, 0.0
    %vm2010 = vcmp.gt.f32.partialorder %v1970, 0.0
    %vm2011 = vcmp.gt.f32.partialorder %v1874, 0.0
    %vm2012 = vcmp.gt.f32.partialorder %v1972, 0.0
    %vm2013 = vcmp.gt.f32.partialorder %v1877, 0.0
    %vm2014 = vcmp.gt.f32.partialorder %v1975, 0.0
    %vm2015 = vcmp.gt.f32.partialorder %v1879, 0.0
    %vm2016 = vcmp.gt.f32.partialorder %v1977, 0.0
    %vm2017 = vcmp.gt.f32.partialorder %v1882, 0.0
    %vm2018 = vcmp.gt.f32.partialorder %v1980, 0.0
    %vm2019 = vcmp.gt.f32.partialorder %v1884, 0.0
    %vm2020 = vcmp.gt.f32.partialorder %v1982, 0.0
    %vm2021 = vcmp.gt.f32.partialorder %v1887, 0.0
    %vm2022 = vcmp.gt.f32.partialorder %v1985, 0.0
    %vm2023 = vcmp.gt.f32.partialorder %v1889, 0.0
    %vm2024 = vcmp.gt.f32.partialorder %v1987, 0.0
    %vm2025 = vcmp.gt.f32.partialorder %v1892, 0.0
    %vm2026 = vcmp.gt.f32.partialorder %v1990, 0.0
    %vm2027 = vcmp.gt.f32.partialorder %v1894, 0.0
    %vm2028 = vcmp.gt.f32.partialorder %v1992, 0.0
    %vm2029 = vcmp.gt.f32.partialorder %v1897, 0.0
    %vm2030 = vcmp.gt.f32.partialorder %v1995, 0.0
    %vm2031 = vcmp.gt.f32.partialorder %v1899, 0.0
    %vm2032 = vcmp.gt.f32.partialorder %v1997, 0.0
    %vm2033 = vcmp.gt.f32.partialorder %v1902, 0.0
    %vm2034 = vcmp.gt.f32.partialorder %v2000, 0.0
    %vm2035 = vcmp.gt.f32.partialorder %v1904, 0.0
    %vm2036 = vcmp.gt.f32.partialorder %v2002, 0.0
    %vm2037 = vcmp.gt.f32.partialorder %v1907, 0.0
    %vm2038 = vcmp.gt.f32.partialorder %v2005, 0.0
    %vm2039 = vcmp.gt.f32.partialorder %v1909, 0.0
    %vm2040 = vcmp.gt.f32.partialorder %v2007, 0.0
    %v2041 = vmul.f32 %v1872, 0.2
    %v2042 = vmul.f32 %v1970, 0.2
    %v2043 = vmul.f32 %v1874, 0.2
    %v2044 = vmul.f32 %v1972, 0.2
    %v2045 = vmul.f32 %v1877, 0.2
    %v2046 = vmul.f32 %v1975, 0.2
    %v2047 = vmul.f32 %v1879, 0.2
    %v2048 = vmul.f32 %v1977, 0.2
    %v2049 = vmul.f32 %v1882, 0.2
    %v2050 = vmul.f32 %v1980, 0.2
    %v2051 = vmul.f32 %v1884, 0.2
    %v2052 = vmul.f32 %v1982, 0.2
    %v2053 = vmul.f32 %v1887, 0.2
    %v2054 = vmul.f32 %v1985, 0.2
    %v2055 = vmul.f32 %v1889, 0.2
    %v2056 = vmul.f32 %v1987, 0.2
    %v2057 = vmul.f32 %v1892, 0.2
    %v2058 = vmul.f32 %v1990, 0.2
    %v2059 = vmul.f32 %v1894, 0.2
    %v2060 = vmul.f32 %v1992, 0.2
    %v2061 = vmul.f32 %v1897, 0.2
    %v2062 = vmul.f32 %v1995, 0.2
    %v2063 = vmul.f32 %v1899, 0.2
    %v2064 = vmul.f32 %v1997, 0.2
    %v2065 = vmul.f32 %v1902, 0.2
    %v2066 = vmul.f32 %v2000, 0.2
    %v2067 = vmul.f32 %v1904, 0.2
    %v2068 = vmul.f32 %v2002, 0.2
    %v2069 = vmul.f32 %v1907, 0.2
    %v2070 = vmul.f32 %v2005, 0.2
    %v2071 = vmul.f32 %v1909, 0.2
    %v2072 = vmul.f32 %v2007, 0.2
    %v2073 = vsel %vm2009, %v1872, %v2041
    %v2074 = vsel %vm2010, %v1970, %v2042
    %v2075 = vsel %vm2011, %v1874, %v2043
    %v2076 = vsel %vm2012, %v1972, %v2044
    %v2077 = vsel %vm2013, %v1877, %v2045
    %v2078 = vsel %vm2014, %v1975, %v2046
    %v2079 = vsel %vm2015, %v1879, %v2047
    %v2080 = vsel %vm2016, %v1977, %v2048
    %v2081 = vsel %vm2017, %v1882, %v2049
    %v2082 = vsel %vm2018, %v1980, %v2050
    %v2083 = vsel %vm2019, %v1884, %v2051
    %v2084 = vsel %vm2020, %v1982, %v2052
    %v2085 = vsel %vm2021, %v1887, %v2053
    %v2086 = vsel %vm2022, %v1985, %v2054
    %v2087 = vsel %vm2023, %v1889, %v2055
    %v2088 = vsel %vm2024, %v1987, %v2056
    %v2089 = vsel %vm2025, %v1892, %v2057
    %v2090 = vsel %vm2026, %v1990, %v2058
    %v2091 = vsel %vm2027, %v1894, %v2059
    %v2092 = vsel %vm2028, %v1992, %v2060
    %v2093 = vsel %vm2029, %v1897, %v2061
    %v2094 = vsel %vm2030, %v1995, %v2062
    %v2095 = vsel %vm2031, %v1899, %v2063
    %v2096 = vsel %vm2032, %v1997, %v2064
    %v2097 = vsel %vm2033, %v1902, %v2065
    %v2098 = vsel %vm2034, %v2000, %v2066
    %v2099 = vsel %vm2035, %v1904, %v2067
    %v2100 = vsel %vm2036, %v2002, %v2068
    %v2101 = vsel %vm2037, %v1907, %v2069
    %v2102 = vsel %vm2038, %v2005, %v2070
    %v2103 = vsel %vm2039, %v1909, %v2071
    %v2104 = vsel %vm2040, %v2007, %v2072
    %v2105 = vld [vmem:[%s5] sm:$0x3]
    %v2107 = vperm.slane %v2105, 0
    %v2108 = vperm.slane %v2105, 1
    %v2111 = vmul.f32 %v2073, %v2107
    %v2112 = vmul.f32 %v2074, %v2108
    %v2113 = vmul.f32 %v2075, %v2107
    %v2114 = vmul.f32 %v2076, %v2108
    %v2115 = vmul.f32 %v2077, %v2107
    %v2116 = vmul.f32 %v2078, %v2108
    %v2117 = vmul.f32 %v2079, %v2107
    %v2118 = vmul.f32 %v2080, %v2108
    %v2119 = vmul.f32 %v2081, %v2107
    %v2120 = vmul.f32 %v2082, %v2108
    %v2121 = vmul.f32 %v2083, %v2107
    %v2122 = vmul.f32 %v2084, %v2108
    %v2123 = vmul.f32 %v2085, %v2107
    %v2124 = vmul.f32 %v2086, %v2108
    %v2125 = vmul.f32 %v2087, %v2107
    %v2126 = vmul.f32 %v2088, %v2108
    %v2127 = vmul.f32 %v2089, %v2107
    %v2128 = vmul.f32 %v2090, %v2108
    %v2129 = vmul.f32 %v2091, %v2107
    %v2130 = vmul.f32 %v2092, %v2108
    %v2131 = vmul.f32 %v2093, %v2107
    %v2132 = vmul.f32 %v2094, %v2108
    %v2133 = vmul.f32 %v2095, %v2107
    %v2134 = vmul.f32 %v2096, %v2108
    %v2135 = vmul.f32 %v2097, %v2107
    %v2136 = vmul.f32 %v2098, %v2108
    %v2137 = vmul.f32 %v2099, %v2107
    %v2138 = vmul.f32 %v2100, %v2108
    %v2139 = vmul.f32 %v2101, %v2107
    %v2140 = vmul.f32 %v2102, %v2108
    %v2141 = vmul.f32 %v2103, %v2107
    %v2142 = vmul.f32 %v2104, %v2108
    %v2143 = vadd.f32 %v2111, %v2112
    %2144 = vadd.xlane.f32.xlu0 %v2143
    %v2145 = vpop.xlane.xlu0 %2144
    %v2146 = vadd.f32 %v2113, %v2114
    %2147 = vadd.xlane.f32.xlu0 %v2146
    %v2148 = vpop.xlane.xlu0 %2147
    %v2149 = vadd.f32 %v2115, %v2116
    %2150 = vadd.xlane.f32.xlu0 %v2149
    %v2151 = vpop.xlane.xlu0 %2150
    %v2152 = vadd.f32 %v2117, %v2118
    %2153 = vadd.xlane.f32.xlu0 %v2152
    %v2154 = vpop.xlane.xlu0 %2153
    %v2155 = vadd.f32 %v2119, %v2120
    %2156 = vadd.xlane.f32.xlu0 %v2155
    %v2157 = vpop.xlane.xlu0 %2156
    %v2158 = vadd.f32 %v2121, %v2122
    %2159 = vadd.xlane.f32.xlu0 %v2158
    %v2160 = vpop.xlane.xlu0 %2159
    %v2161 = vadd.f32 %v2123, %v2124
    %2162 = vadd.xlane.f32.xlu0 %v2161
    %v2163 = vpop.xlane.xlu0 %2162
    %v2164 = vadd.f32 %v2125, %v2126
    %2165 = vadd.xlane.f32.xlu0 %v2164
    %v2166 = vpop.xlane.xlu0 %2165
    %v2167 = vadd.f32 %v2127, %v2128
    %2168 = vadd.xlane.f32.xlu0 %v2167
    %v2169 = vpop.xlane.xlu0 %2168
    %v2170 = vadd.f32 %v2129, %v2130
    %2171 = vadd.xlane.f32.xlu0 %v2170
    %v2172 = vpop.xlane.xlu0 %2171
    %v2173 = vadd.f32 %v2131, %v2132
    %2174 = vadd.xlane.f32.xlu0 %v2173
    %v2175 = vpop.xlane.xlu0 %2174
    %v2176 = vadd.f32 %v2133, %v2134
    %2177 = vadd.xlane.f32.xlu0 %v2176
    %v2178 = vpop.xlane.xlu0 %2177
    %v2179 = vadd.f32 %v2135, %v2136
    %2180 = vadd.xlane.f32.xlu0 %v2179
    %v2181 = vpop.xlane.xlu0 %2180
    %v2182 = vadd.f32 %v2137, %v2138
    %2183 = vadd.xlane.f32.xlu0 %v2182
    %v2184 = vpop.xlane.xlu0 %2183
    %v2185 = vadd.f32 %v2139, %v2140
    %2186 = vadd.xlane.f32.xlu0 %v2185
    %v2187 = vpop.xlane.xlu0 %2186
    %v2188 = vadd.f32 %v2141, %v2142
    %2189 = vadd.xlane.f32.xlu0 %v2188
    %v2190 = vpop.xlane.xlu0 %2189
    %2191 = vxpose.xlu0.b32.start [1/16] %v2145, 128
    %2192 = vxpose.xlu0.b32.cont [2/16] %v2148, 128
    %2193 = vxpose.xlu0.b32.cont [3/16] %v2151, 128
    %2194 = vxpose.xlu0.b32.cont [4/16] %v2154, 128
    %2195 = vxpose.xlu0.b32.cont [5/16] %v2157, 128
    %2196 = vxpose.xlu0.b32.cont [6/16] %v2160, 128
    %2197 = vxpose.xlu0.b32.cont [7/16] %v2163, 128
    %2198 = vxpose.xlu0.b32.cont [8/16] %v2166, 128
    %2199 = vxpose.xlu0.b32.cont [9/16] %v2169, 128
    %2200 = vxpose.xlu0.b32.cont [10/16] %v2172, 128
    %2201 = vxpose.xlu0.b32.cont [11/16] %v2175, 128
    %2202 = vxpose.xlu0.b32.cont [12/16] %v2178, 128
    %2203 = vxpose.xlu0.b32.cont [13/16] %v2181, 128
    %2204 = vxpose.xlu0.b32.cont [14/16] %v2184, 128
    %2205 = vxpose.xlu0.b32.cont [15/16] %v2187, 128
    %2206 = vxpose.xlu0.b32.end [16/16] %v2190, 128
    %v2207 = vpop.trf.xlu0
    %v2208 = vpop.trf.xlu0
    %v2209 = vpop.trf.xlu0
    %v2210 = vpop.trf.xlu0
    %v2211 = vpop.trf.xlu0
    %v2212 = vpop.trf.xlu0
    %v2213 = vpop.trf.xlu0
    %v2214 = vpop.trf.xlu0
    %v2215 = vpop.trf.xlu0
    %v2216 = vpop.trf.xlu0
    %v2217 = vpop.trf.xlu0
    %v2218 = vpop.trf.xlu0
    %v2219 = vpop.trf.xlu0
    %v2220 = vpop.trf.xlu0
    %v2221 = vpop.trf.xlu0
    %v2222 = vpop.trf.xlu0
    %v2223 = vld [vmem:[#allocation2] sm:$0x1]
    %2225 = vset.pattern.permute.xlu0 0
    %2226 = vperm.xlu0 %2225, %v2223
    %v2227 = vpop.permute.xlu0 %2226
    %v2229 = vperm.slane %v2227, 0
    %v2230 = vadd.f32 %v2207, %v2229
    %v2231 = vmax.f32 %v2230, -30.0
    %v2232 = vmin.f32 %v2231, 30.0
    %v2233 = vsub.f32 0.0, %v2232
    %v2234 = vmul.f32 %v2233, 1.442695
    %v2235 = vpow.pop %v2234
    %v2236 = vadd.f32 %v2235, 1.0
    %v2237 = vrcp.pop %v2236
    %2238 = vst [vmem:[#allocation3] sm:$0x1] %v2237
    // Predicated region
    $region30: #{tpu_custom_call.1} parent=1 // pred_check
      _
    $region31: #{tpu_custom_call.1} parent=1 // pred_check_branch
      %2240 = sbr.rel (0) target = $region33
    $region32: #{tpu_custom_call.1} parent=1 // pred_region
      %2242 = vsyncadd [#allocation4], 0
      %s2244 = sshll.u32 [#allocation3], 4
      %s2245 = int_to_ptr.vmem [resolvable:$true] %s2244
      %s2246 = sshll.u32 %s7, 4
      %s2247 = int_to_ptr.hbm [resolvable:$true] %s2246
      %2249 = dma.vmem_to_hbm [thread:$0]  %s2245, 16, %s2247, [#allocation4]
    $region33: #{tpu_custom_call.1} parent=1 // pred_fallthru
      _
    // Predicated region
    $region34: #{tpu_custom_call.1} parent=1 // pred_check
      _
    $region35: #{tpu_custom_call.1} parent=1 // pred_check_branch
      %2251 = sbr.rel (0) target = $region37
    $region36: #{tpu_custom_call.1} parent=1 // pred_region
      %2253 = dma.done [#allocation4], 16
    $region37: #{tpu_custom_call.1} parent=1 // pred_fallthru
      _
    %2254 = vsyncpa [#allocation4], 1

</llo_original>
